<compile_context>
chip_gen: v5e
topology: v5e:2x2
jax: 0.10.0
libtpu: 0.0.40
codegen_flags: <defaults>
</compile_context>

<pallas_src>
import functools

import jax
import jax.numpy as jnp
import jax.scipy.linalg as jsl
from jax import lax
from jax.experimental import pallas as pl
from jax.experimental.pallas import tpu as pltpu


def _round_up(x, m):
    return ((x + m - 1) // m) * m


def _projection_kernel(et_ref, f_ref, out_ref, acc_ref, *,
                       v_true, tv, n_chunks, mask_tail):
    """acc (K, C) += evecs_trans[:, chunk] @ feat[chunk, :] over vertex chunks.

    Grid = (num_parts, n_chunks): axis 0 ("parallel") splits the vertex range
    across TensorCores, axis 1 ("arbitrary") is the in-core reduction.
    """
    part = pl.program_id(0)
    step = pl.program_id(1)

    @pl.when(step == 0)
    def _():
        acc_ref[...] = jnp.zeros_like(acc_ref)

    et = et_ref[...]                       # (K, tv)
    f = f_ref[...]                         # (tv, C)
    if et.dtype != f.dtype:                # e.g. bf16 features + f32 bases
        common = jnp.promote_types(et.dtype, f.dtype)
        et = et.astype(common)
        f = f.astype(common)

    if mask_tail:
        # Logical (un-clamped) start of this chunk.  Everything at/past the
        # true vertex count is either unspecified (partial block) or stale
        # re-read data (clamped block index) -> zero BOTH operands so
        # 0 * garbage (possibly NaN) can never reach the accumulator.
        start = (part * n_chunks + step) * tv
        vidx_et = start + lax.broadcasted_iota(jnp.int32, et.shape, 1)
        et = jnp.where(vidx_et < v_true, et, jnp.zeros_like(et))
        vidx_f = start + lax.broadcasted_iota(jnp.int32, f.shape, 0)
        f = jnp.where(vidx_f < v_true, f, jnp.zeros_like(f))

    # HBM-bound streaming phase; MXU passes are hidden under the DMA.
    acc_ref[...] += jnp.dot(et, f, preferred_element_type=jnp.float32)

    @pl.when(step == n_chunks - 1)
    def _():
        out_ref[0] = acc_ref[...]


def _spectral_projection(et, f, *, tv, num_parts):
    """Compute evecs_trans (K, V) @ feat (V, C) -> (K, C) f32 with Pallas."""
    K, V = et.shape
    Vf, C = f.shape
    assert V == Vf, "evecs_trans and feat disagree on vertex count"

    # Lane-aligned chunk, never larger than the 128-rounded vertex count.
    tv = _round_up(max(int(tv), 128), 128)
    tv_eff = min(tv, _round_up(V, 128))

    total_chunks = pl.cdiv(V, tv_eff)
    num_parts = max(1, min(int(num_parts), total_chunks))
    n_chunks = pl.cdiv(total_chunks, num_parts)
    mask_tail = (num_parts * n_chunks * tv_eff) != V
    last_block = total_chunks - 1

    # Clamp logical block indices into range so every auto-generated DMA is
    # in-bounds; the in-kernel mask (driven by the *logical* index) zeroes
    # any chunk that was clamped or only partially covers real vertices.
    def et_map(p, s):
        return (0, jnp.minimum(p * n_chunks + s, last_block))

    def f_map(p, s):
        return (jnp.minimum(p * n_chunks + s, last_block), 0)

    kernel = functools.partial(
        _projection_kernel, v_true=V, tv=tv_eff, n_chunks=n_chunks,
        mask_tail=mask_tail)

    partials = pl.pallas_call(
        kernel,
        out_shape=jax.ShapeDtypeStruct((num_parts, K, C), jnp.float32),
        grid_spec=pltpu.PrefetchScalarGridSpec(
            num_scalar_prefetch=0,
            grid=(num_parts, n_chunks),
            in_specs=[
                pl.BlockSpec((K, tv_eff), et_map),      # evecs_trans chunk
                pl.BlockSpec((tv_eff, C), f_map),       # feat chunk
            ],
            out_specs=pl.BlockSpec((1, K, C), lambda p, s: (p, 0, 0)),
            scratch_shapes=[pltpu.VMEM((K, C), jnp.float32)],
        ),
        compiler_params=pltpu.CompilerParams(
            dimension_semantics=("parallel", "arbitrary")),
    )(et, f)

    return jnp.sum(partials, axis=0)                    # (K, C) float32


def _resolvent_mask(evals_x, evals_y, gamma):
    # Standard resolvent mask (Ren et al.).  `get_mask` is not defined in the
    # reference snippet; this is the mask RegularizedFMNet is paired with.
    scale = jnp.maximum(jnp.maximum(jnp.max(evals_x), jnp.max(evals_y)), 1e-12)
    g1 = ((evals_x / scale) ** gamma)[None, :]          # columns: x spectrum
    g2 = ((evals_y / scale) ** gamma)[:, None]          # rows:    y spectrum
    re = g2 / (g2 ** 2 + 1.0) - g1 / (g1 ** 2 + 1.0)
    im = 1.0 / (g2 ** 2 + 1.0) - 1.0 / (g1 ** 2 + 1.0)
    return re ** 2 + im ** 2                            # (K, K)


@functools.partial(
    jax.jit, static_argnames=("lambda_", "resolvant_gamma", "tv", "num_parts"))
def regularized_fmnet(feat_x, feat_y, evals_x, evals_y,
                      evecs_trans_x, evecs_trans_y,
                      lambda_=0.001, resolvant_gamma=0.5,
                      tv=8192, num_parts=2):
    """JAX/Pallas equivalent of RegularizedFMNet.forward.  Returns (1, K, K).

    `tv` is the per-step vertex chunk (rounded to a multiple of 128; 8192
    default, 16384 is a good choice on v7x).  `num_parts` splits the vertex
    stream over a "parallel" grid axis so v7x's two TensorCores share it.
    """
    # The module's bmm requires batch == 1 (evecs_trans/evals are unsqueezed).
    fx = feat_x.reshape(feat_x.shape[-2], feat_x.shape[-1])            # (Vx, C)
    fy = feat_y.reshape(feat_y.shape[-2], feat_y.shape[-1])            # (Vy, C)
    etx = evecs_trans_x.reshape(evecs_trans_x.shape[-2], evecs_trans_x.shape[-1])
    ety = evecs_trans_y.reshape(evecs_trans_y.shape[-2], evecs_trans_y.shape[-1])
    evx = evals_x.reshape(-1).astype(jnp.float32)                      # (K,)
    evy = evals_y.reshape(-1).astype(jnp.float32)                      # (K,)

    # ---- HBM-bound spectral projections (Pallas), one call per stream ----
    A = _spectral_projection(etx, fx, tv=tv, num_parts=num_parts)      # (K, C)
    B = _spectral_projection(ety, fy, tv=tv, num_parts=num_parts)      # (K, C)

    # ---- tiny O(K^2 C) / O(K^4) epilogue in XLA ----
    AAt = jnp.dot(A, A.T, precision=lax.Precision.HIGHEST)             # (K, K)
    BAt = jnp.dot(B, A.T, precision=lax.Precision.HIGHEST)             # (K, K)
    D = _resolvent_mask(evx, evy, resolvant_gamma)                     # (K, K)

    # TODO(synk): torch.inverse has no Pallas primitive; the regularized
    # solves run in XLA.  M = AAt + lambda * diag(D_i) is SPD, so use a
    # vmapped Cholesky solve (cheaper / better conditioned than LU).
    def _solve_row(d_row, b_row):
        M = AAt + lambda_ * jnp.diag(d_row)
        cf = jsl.cho_factor(M, lower=True)
        return jsl.cho_solve(cf, b_row[:, None])[:, 0]

    C_rows = jax.vmap(_solve_row)(D, BAt)                              # (K, K)
    return C_rows[None]                                                # (1,K,K)


def _reference(feat_x, feat_y, evals_x, evals_y, etx, ety,
               lambda_=0.001, gamma=0.5):
    """Pure-JAX mirror of the PyTorch forward (correctness check)."""
    A = jnp.dot(etx, feat_x[0], precision=lax.Precision.HIGHEST)
    B = jnp.dot(ety, feat_y[0], precision=lax.Precision.HIGHEST)
    scale = jnp.maximum(jnp.max(evals_x), jnp.max(evals_y))
    g1 = ((evals_x / scale) ** gamma)[None, :]
    g2 = ((evals_y / scale) ** gamma)[:, None]
    re = g2 / (g2 ** 2 + 1) - g1 / (g1 ** 2 + 1)
    im = 1 / (g2 ** 2 + 1) - 1 / (g1 ** 2 + 1)
    D = re ** 2 + im ** 2
    AAt = jnp.dot(A, A.T, precision=lax.Precision.HIGHEST)
    BAt = jnp.dot(B, A.T, precision=lax.Precision.HIGHEST)
    rows = [jnp.linalg.solve(AAt + lambda_ * jnp.diag(D[i]), BAt[i])
            for i in range(evals_x.shape[0])]
    return jnp.stack(rows)[None]


if __name__ == "__main__":
    key = jax.random.PRNGKey(0)
    Vx, Vy, C, K = 300, 260, 32, 16          # deliberately not multiples of 128
    k1, k2, k3, k4, k5, k6 = jax.random.split(key, 6)

    feat_x = jax.random.normal(k1, (1, Vx, C), jnp.float32)
    feat_y = jax.random.normal(k2, (1, Vy, C), jnp.float32)
    # Laplacian-like eigenvalues: non-negative, sorted.
    evals_x = jnp.sort(jax.random.uniform(k3, (K,), jnp.float32)) * 10.0
    evals_y = jnp.sort(jax.random.uniform(k4, (K,), jnp.float32)) * 10.0
    evecs_trans_x = jax.random.normal(k5, (K, Vx), jnp.float32) / jnp.sqrt(Vx)
    evecs_trans_y = jax.random.normal(k6, (K, Vy), jnp.float32) / jnp.sqrt(Vy)

    ref = _reference(feat_x, feat_y, evals_x, evals_y,
                     evecs_trans_x, evecs_trans_y)

    # Default path: a single 384-vertex chunk per stream (one grid step).
    out_default = jax.block_until_ready(
        regularized_fmnet(feat_x, feat_y, evals_x, evals_y,
                          evecs_trans_x, evecs_trans_y))
    # Small-chunk path: exercises the multi-chunk reduction, the 2-way
    # "parallel" partition and the clamped + masked tail blocks.
    out_tiled = jax.block_until_ready(
        regularized_fmnet(feat_x, feat_y, evals_x, evals_y,
                          evecs_trans_x, evecs_trans_y, tv=128, num_parts=2))

    assert out_default.shape == (1, K, K)
    assert out_tiled.shape == (1, K, K)
    assert jnp.allclose(out_default, ref, atol=2e-2, rtol=2e-2), \
        "mismatch (default tv)"
    assert jnp.allclose(out_tiled, ref, atol=2e-2, rtol=2e-2), \
        "mismatch (tv=128, num_parts=2)"
    print("KERNEL_OK")
</pallas_src>

<mosaic_0001>
module attributes {stable_mosaic.version = 11 : i64} {
  func.func @_projection_kernel(%arg0: i32, %arg1: i32, %arg2: memref<16x384xf32, #tpu.memory_space<vmem>>, %arg3: memref<384x32xf32, #tpu.memory_space<vmem>>, %arg4: memref<1x16x32xf32, #tpu.memory_space<vmem>>, %arg5: memref<16x32xf32, #tpu.memory_space<vmem>>) attributes {dimension_semantics = [#tpu.dimension_semantics<parallel>, #tpu.dimension_semantics<arbitrary>], iteration_bounds = array<i64: 1, 1>, scalar_prefetch = 0 : i64, scratch_operands = 1 : i64, tpu.core_type = #tpu.core_type<tc>, window_params = [{transform_indices = @transform_0, window_bounds = array<i64: 16, 384>}, {transform_indices = @transform_1, window_bounds = array<i64: 384, 32>}, {transform_indices = @transform_2, window_bounds = array<i64: 1, 16, 32>}]} {
    %c0_i32 = arith.constant 0 : i32
    %0 = arith.cmpi eq, %arg1, %c0_i32 : i32
    %1 = arith.extui %0 : i1 to i32
    %c0_i32_0 = arith.constant 0 : i32
    %2 = arith.cmpi ne, %1, %c0_i32_0 : i32
    scf.if %2 {
      %cst_13 = arith.constant 0.000000e+00 : f32
      %29 = vector.broadcast %cst_13 : f32 to vector<16x32xf32>
      %c0_14 = arith.constant 0 : index
      %c0_15 = arith.constant 0 : index
      %30 = vector.load %arg5[%c0_14, %c0_15] : memref<16x32xf32, #tpu.memory_space<vmem>>, vector<16x32xf32>
      tpu.vector_store %arg5[%c0_14, %c0_15], %29 {strides = array<i32>} : memref<16x32xf32, #tpu.memory_space<vmem>>, vector<16x32xf32>,
    } else {
    }
    %c0 = arith.constant 0 : index
    %c0_1 = arith.constant 0 : index
    %3 = vector.load %arg2[%c0, %c0_1] : memref<16x384xf32, #tpu.memory_space<vmem>>, vector<16x384xf32>
    %c0_2 = arith.constant 0 : index
    %c0_3 = arith.constant 0 : index
    %4 = vector.load %arg3[%c0_2, %c0_3] : memref<384x32xf32, #tpu.memory_space<vmem>>, vector<384x32xf32>
    %c1_i32 = arith.constant 1 : i32
    %5 = arith.muli %arg0, %c1_i32 : i32
    %6 = arith.addi %5, %arg1 : i32
    %c384_i32 = arith.constant 384 : i32
    %7 = arith.muli %6, %c384_i32 : i32
    %8 = tpu.iota {dimensions = array<i32: 1>} : vector<16x384xi32>
    %9 = vector.broadcast %7 : i32 to vector<16x384xi32>
    %10 = arith.addi %9, %8 : vector<16x384xi32>
    %c260_i32 = arith.constant 260 : i32
    %11 = vector.broadcast %c260_i32 : i32 to vector<16x384xi32>
    %12 = arith.cmpi slt, %10, %11 : vector<16x384xi32>
    %cst = arith.constant 0.000000e+00 : f32
    %13 = vector.broadcast %cst : f32 to vector<16x384xf32>
    %14 = arith.select %12, %3, %13 : vector<16x384xi1>, vector<16x384xf32>
    %15 = tpu.iota {dimensions = array<i32: 0>} : vector<384x32xi32>
    %16 = vector.broadcast %7 : i32 to vector<384x32xi32>
    %17 = arith.addi %16, %15 : vector<384x32xi32>
    %c260_i32_4 = arith.constant 260 : i32
    %18 = vector.broadcast %c260_i32_4 : i32 to vector<384x32xi32>
    %19 = arith.cmpi slt, %17, %18 : vector<384x32xi32>
    %cst_5 = arith.constant 0.000000e+00 : f32
    %20 = vector.broadcast %cst_5 : f32 to vector<384x32xf32>
    %21 = arith.select %19, %4, %20 : vector<384x32xi1>, vector<384x32xf32>
    %c0_6 = arith.constant 0 : index
    %c0_7 = arith.constant 0 : index
    %22 = vector.load %arg5[%c0_6, %c0_7] : memref<16x32xf32, #tpu.memory_space<vmem>>, vector<16x32xf32>
    %cst_8 = arith.constant dense<0.000000e+00> : vector<16x32xf32>
    %23 = tpu.matmul %14, %21, %cst_8 {dimension_numbers = #tpu.dot_dimension_numbers<[1], [0], [0], [1], [0, 0, 1, 1], [], []>} : vector<16x384xf32>, vector<384x32xf32>, vector<16x32xf32> -> vector<16x32xf32>
    %24 = arith.addf %22, %23 : vector<16x32xf32>
    %c0_9 = arith.constant 0 : index
    %c0_10 = arith.constant 0 : index
    %25 = vector.load %arg5[%c0_9, %c0_10] : memref<16x32xf32, #tpu.memory_space<vmem>>, vector<16x32xf32>
    tpu.vector_store %arg5[%c0_9, %c0_10], %24 {strides = array<i32>} : memref<16x32xf32, #tpu.memory_space<vmem>>, vector<16x32xf32>,
    %c0_i32_11 = arith.constant 0 : i32
    %26 = arith.cmpi eq, %arg1, %c0_i32_11 : i32
    %27 = arith.extui %26 : i1 to i32
    %c0_i32_12 = arith.constant 0 : i32
    %28 = arith.cmpi ne, %27, %c0_i32_12 : i32
    scf.if %28 {
      %c0_13 = arith.constant 0 : index
      %c0_14 = arith.constant 0 : index
      %29 = vector.load %arg5[%c0_13, %c0_14] : memref<16x32xf32, #tpu.memory_space<vmem>>, vector<16x32xf32>
      %c0_15 = arith.constant 0 : index
      %c0_16 = arith.constant 0 : index
      %c0_17 = arith.constant 0 : index
      %30 = vector.load %arg4[%c0_15, %c0_16, %c0_17] : memref<1x16x32xf32, #tpu.memory_space<vmem>>, vector<1x16x32xf32>
      %31 = vector.shape_cast %30 : vector<1x16x32xf32> to vector<16x32xf32>
      %32 = vector.shape_cast %29 : vector<16x32xf32> to vector<1x16x32xf32>
      tpu.vector_store %arg4[%c0_15, %c0_16, %c0_17], %32 {strides = array<i32>} : memref<1x16x32xf32, #tpu.memory_space<vmem>>, vector<1x16x32xf32>,
    } else {
    }
    return
  }
  func.func @transform_0(%arg0: i32, %arg1: i32) -> (i32, i32) {
    %c1_i32 = arith.constant 1 : i32
    %0 = arith.muli %arg0, %c1_i32 : i32
    %1 = arith.addi %0, %arg1 : i32
    %c0_i32 = arith.constant 0 : i32
    %2 = arith.minsi %1, %c0_i32 : i32
    %c0_i32_0 = arith.constant 0 : i32
    %c0_i32_1 = arith.constant 0 : i32
    return %c0_i32_0, %2 : i32, i32
  }
  func.func @transform_1(%arg0: i32, %arg1: i32) -> (i32, i32) {
    %c1_i32 = arith.constant 1 : i32
    %0 = arith.muli %arg0, %c1_i32 : i32
    %1 = arith.addi %0, %arg1 : i32
    %c0_i32 = arith.constant 0 : i32
    %2 = arith.minsi %1, %c0_i32 : i32
    %c0_i32_0 = arith.constant 0 : i32
    %c0_i32_1 = arith.constant 0 : i32
    return %2, %c0_i32_0 : i32, i32
  }
  func.func @transform_2(%arg0: i32, %arg1: i32) -> (i32, i32, i32) {
    %c0_i32 = arith.constant 0 : i32
    %c0_i32_0 = arith.constant 0 : i32
    %c0_i32_1 = arith.constant 0 : i32
    return %arg0, %c0_i32, %c0_i32_0 : i32, i32, i32
  }
}

module attributes {stable_mosaic.version = 11 : i64} {
  func.func @_projection_kernel(%arg0: i32, %arg1: i32, %arg2: memref<16x384xf32, #tpu.memory_space<vmem>>, %arg3: memref<384x32xf32, #tpu.memory_space<vmem>>, %arg4: memref<1x16x32xf32, #tpu.memory_space<vmem>>, %arg5: memref<16x32xf32, #tpu.memory_space<vmem>>) attributes {dimension_semantics = [#tpu.dimension_semantics<parallel>, #tpu.dimension_semantics<arbitrary>], iteration_bounds = array<i64: 1, 1>, scalar_prefetch = 0 : i64, scratch_operands = 1 : i64, tpu.core_type = #tpu.core_type<tc>, window_params = [{transform_indices = @transform_0, window_bounds = array<i64: 16, 384>}, {transform_indices = @transform_1, window_bounds = array<i64: 384, 32>}, {transform_indices = @transform_2, window_bounds = array<i64: 1, 16, 32>}]} {
    %c0_i32 = arith.constant 0 : i32
    %0 = arith.cmpi eq, %arg1, %c0_i32 : i32
    %1 = arith.extui %0 : i1 to i32
    %c0_i32_0 = arith.constant 0 : i32
    %2 = arith.cmpi ne, %1, %c0_i32_0 : i32
    scf.if %2 {
      %cst_13 = arith.constant 0.000000e+00 : f32
      %29 = vector.broadcast %cst_13 : f32 to vector<16x32xf32>
      %c0_14 = arith.constant 0 : index
      %c0_15 = arith.constant 0 : index
      %30 = vector.load %arg5[%c0_14, %c0_15] : memref<16x32xf32, #tpu.memory_space<vmem>>, vector<16x32xf32>
      tpu.vector_store %arg5[%c0_14, %c0_15], %29 {strides = array<i32>} : memref<16x32xf32, #tpu.memory_space<vmem>>, vector<16x32xf32>,
    } else {
    }
    %c0 = arith.constant 0 : index
    %c0_1 = arith.constant 0 : index
    %3 = vector.load %arg2[%c0, %c0_1] : memref<16x384xf32, #tpu.memory_space<vmem>>, vector<16x384xf32>
    %c0_2 = arith.constant 0 : index
    %c0_3 = arith.constant 0 : index
    %4 = vector.load %arg3[%c0_2, %c0_3] : memref<384x32xf32, #tpu.memory_space<vmem>>, vector<384x32xf32>
    %c1_i32 = arith.constant 1 : i32
    %5 = arith.muli %arg0, %c1_i32 : i32
    %6 = arith.addi %5, %arg1 : i32
    %c384_i32 = arith.constant 384 : i32
    %7 = arith.muli %6, %c384_i32 : i32
    %8 = tpu.iota {dimensions = array<i32: 1>} : vector<16x384xi32>
    %9 = vector.broadcast %7 : i32 to vector<16x384xi32>
    %10 = arith.addi %9, %8 : vector<16x384xi32>
    %c300_i32 = arith.constant 300 : i32
    %11 = vector.broadcast %c300_i32 : i32 to vector<16x384xi32>
    %12 = arith.cmpi slt, %10, %11 : vector<16x384xi32>
    %cst = arith.constant 0.000000e+00 : f32
    %13 = vector.broadcast %cst : f32 to vector<16x384xf32>
    %14 = arith.select %12, %3, %13 : vector<16x384xi1>, vector<16x384xf32>
    %15 = tpu.iota {dimensions = array<i32: 0>} : vector<384x32xi32>
    %16 = vector.broadcast %7 : i32 to vector<384x32xi32>
    %17 = arith.addi %16, %15 : vector<384x32xi32>
    %c300_i32_4 = arith.constant 300 : i32
    %18 = vector.broadcast %c300_i32_4 : i32 to vector<384x32xi32>
    %19 = arith.cmpi slt, %17, %18 : vector<384x32xi32>
    %cst_5 = arith.constant 0.000000e+00 : f32
    %20 = vector.broadcast %cst_5 : f32 to vector<384x32xf32>
    %21 = arith.select %19, %4, %20 : vector<384x32xi1>, vector<384x32xf32>
    %c0_6 = arith.constant 0 : index
    %c0_7 = arith.constant 0 : index
    %22 = vector.load %arg5[%c0_6, %c0_7] : memref<16x32xf32, #tpu.memory_space<vmem>>, vector<16x32xf32>
    %cst_8 = arith.constant dense<0.000000e+00> : vector<16x32xf32>
    %23 = tpu.matmul %14, %21, %cst_8 {dimension_numbers = #tpu.dot_dimension_numbers<[1], [0], [0], [1], [0, 0, 1, 1], [], []>} : vector<16x384xf32>, vector<384x32xf32>, vector<16x32xf32> -> vector<16x32xf32>
    %24 = arith.addf %22, %23 : vector<16x32xf32>
    %c0_9 = arith.constant 0 : index
    %c0_10 = arith.constant 0 : index
    %25 = vector.load %arg5[%c0_9, %c0_10] : memref<16x32xf32, #tpu.memory_space<vmem>>, vector<16x32xf32>
    tpu.vector_store %arg5[%c0_9, %c0_10], %24 {strides = array<i32>} : memref<16x32xf32, #tpu.memory_space<vmem>>, vector<16x32xf32>,
    %c0_i32_11 = arith.constant 0 : i32
    %26 = arith.cmpi eq, %arg1, %c0_i32_11 : i32
    %27 = arith.extui %26 : i1 to i32
    %c0_i32_12 = arith.constant 0 : i32
    %28 = arith.cmpi ne, %27, %c0_i32_12 : i32
    scf.if %28 {
      %c0_13 = arith.constant 0 : index
      %c0_14 = arith.constant 0 : index
      %29 = vector.load %arg5[%c0_13, %c0_14] : memref<16x32xf32, #tpu.memory_space<vmem>>, vector<16x32xf32>
      %c0_15 = arith.constant 0 : index
      %c0_16 = arith.constant 0 : index
      %c0_17 = arith.constant 0 : index
      %30 = vector.load %arg4[%c0_15, %c0_16, %c0_17] : memref<1x16x32xf32, #tpu.memory_space<vmem>>, vector<1x16x32xf32>
      %31 = vector.shape_cast %30 : vector<1x16x32xf32> to vector<16x32xf32>
      %32 = vector.shape_cast %29 : vector<16x32xf32> to vector<1x16x32xf32>
      tpu.vector_store %arg4[%c0_15, %c0_16, %c0_17], %32 {strides = array<i32>} : memref<1x16x32xf32, #tpu.memory_space<vmem>>, vector<1x16x32xf32>,
    } else {
    }
    return
  }
  func.func @transform_0(%arg0: i32, %arg1: i32) -> (i32, i32) {
    %c1_i32 = arith.constant 1 : i32
    %0 = arith.muli %arg0, %c1_i32 : i32
    %1 = arith.addi %0, %arg1 : i32
    %c0_i32 = arith.constant 0 : i32
    %2 = arith.minsi %1, %c0_i32 : i32
    %c0_i32_0 = arith.constant 0 : i32
    %c0_i32_1 = arith.constant 0 : i32
    return %c0_i32_0, %2 : i32, i32
  }
  func.func @transform_1(%arg0: i32, %arg1: i32) -> (i32, i32) {
    %c1_i32 = arith.constant 1 : i32
    %0 = arith.muli %arg0, %c1_i32 : i32
    %1 = arith.addi %0, %arg1 : i32
    %c0_i32 = arith.constant 0 : i32
    %2 = arith.minsi %1, %c0_i32 : i32
    %c0_i32_0 = arith.constant 0 : i32
    %c0_i32_1 = arith.constant 0 : i32
    return %2, %c0_i32_0 : i32, i32
  }
  func.func @transform_2(%arg0: i32, %arg1: i32) -> (i32, i32, i32) {
    %c0_i32 = arith.constant 0 : i32
    %c0_i32_0 = arith.constant 0 : i32
    %c0_i32_1 = arith.constant 0 : i32
    return %arg0, %c0_i32, %c0_i32_0 : i32, i32, i32
  }
}

</mosaic_0001>

<llo_original>
// kernel: custom-call.6
$region0: #{custom-call.6}
  %s0 = inlined_call_operand.vmem [shape: f32[16,16,16], index: 0, kind: input, shape index: {}]
  %s1 = inlined_call_operand.vmem [shape: f32[16,16,16], index: 1, kind: output, shape index: {}]
  $region1: #{custom-call.6} parent=0
    #allocation0 [shape = 'u8[16384]{0}', space=vmem, size = 0x4000, scoped, tag = 'operand span for operand 0']
    #allocation1 [shape = 'u8[16384]{0}', space=vmem, size = 0x4000, scoped, tag = 'operand span for operand 1']
    loop: start=0, step=1, limit=18
    $region2: #{custom-call.6} parent=1 // loop_pre_header
      _
    $region3: #{custom-call.6} parent=1 // loop_header
      %s3 = sphi 0, %s7
      %p4 = scmp.ge.s32.totalorder %s3, 18
      %s10 = sphi 0, %s29
      %s11 = sphi 0, %s25
      %s12 = sphi 0, %s21
      %s13 = sphi 0, %s10
      %s14 = sphi 0, %s11
      %s15 = sphi 0, %s12
      %s16 = sphi 0, %s13
      %s17 = sphi 0, %s14
      %s18 = sphi 0, %s15
    $region4: #{custom-call.6} parent=1 // loop_header_branch
      %6 = sbr.rel (%p4) target = $region8
    $region5: #{custom-call.6} parent=1 // loop_body
      %s8 = ssub.s32 %s3, 1
      %s9 = ssub.s32 %s3, 2
      %s19 = sadd.s32 1, %s12
      %p20 = scmp.ge.s32.totalorder %s19, 1
      %s21 = scalar_select %p20, 0, %s19
      %s22 = sadd.s32 1, %s11
      %s23 = scalar_select %p20, %s22, %s11
      %p24 = scmp.ge.s32.totalorder %s23, 1
      %s25 = scalar_select %p24, 0, %s23
      %s26 = sadd.s32 1, %s10
      %s27 = scalar_select %p24, %s26, %s10
      %p28 = scmp.ge.s32.totalorder %s27, 16
      %s29 = scalar_select %p28, 0, %s27
      %p30 = scmp.le.s32.totalorder 1, %s3
      %p31 = scmp.lt.s32.totalorder %s3, 17
      %p32 = pnand %p30, %p31
      %p33 = pneg %p32
      // Predicated region
      $region9: #{custom-call.6} parent=5 // pred_check
        _
      $region10: #{custom-call.6} parent=5 // pred_check_branch
        %35 = sbr.rel (%p32) target = $region12
      $region11: #{custom-call.6} parent=5 // pred_region
        %s36 = ssub.s32 %s3, 1
      $region12: #{custom-call.6} parent=5 // pred_fallthru
        _
      %p37 = scmp.lt.s32.totalorder %s3, 16
      // Predicated region
      $region13: #{custom-call.6} parent=5 // pred_check
        %p38 = pneg %p37
      $region14: #{custom-call.6} parent=5 // pred_check_branch
        %40 = sbr.rel (%p38) target = $region16
      $region15: #{custom-call.6} parent=5 // pred_region
        %s41 = sand.u32 %s3, 1
        %s42 = sand.u32 %s3, 1
        %s43 = smul.addr %s42, 16
        %s44 = scalar_lea.vmem [#allocation0], %s43
        %s45 = sadd.s32 %s12, %s11
        %s46 = smul.addr %s10, 2
        %s47 = sadd.s32 %s45, %s46
        %s48 = smul.addr %s47, 8
        %s49 = scalar_lea.vmem %s0, %s48
        // Predicated region
        $region17: #{custom-call.6} parent=15 // pred_check
          _
        $region18: #{custom-call.6} parent=15 // pred_check_branch
          %51 = sbr.rel (0) target = $region20
        $region19: #{custom-call.6} parent=15 // pred_region
          // Predicated region
          $region21: #{custom-call.6} parent=19 // pred_check
            _
          $region22: #{custom-call.6} parent=19 // pred_check_branch
            %53 = sbr.rel (0) target = $region24
          $region23: #{custom-call.6} parent=19 // pred_region
            // Predicated region
            $region36: #{custom-call.6} parent=23 // pred_check
              _
            $region37: #{custom-call.6} parent=23 // pred_check_branch
              %71 = sbr.rel (0) target = $region39
            $region38: #{custom-call.6} parent=23 // pred_region
              loop: start=0, step=1, limit=1
              $region40: #{custom-call.6} parent=38 // loop_pre_header
                _
              $region41: #{custom-call.6} parent=38 // loop_header
                %s73 = sphi 0, %s77
                %p74 = scmp.ge.s32.totalorder %s73, 1
                %s78 = sphi %s49, %s49
                %s79 = sphi %s44, %s44
              $region42: #{custom-call.6} parent=38 // loop_header_branch
                %76 = sbr.rel (%p74) target = $region46
              $region43: #{custom-call.6} parent=38 // loop_body
                %v80 = vld [vmem:[%s78] sm:$0xff]
                %81 = vst [vmem:[%s79] sm:$0xff] %v80
                %v82 = vld [vmem:[%s78 + $0x8] sm:$0xff]
                %83 = vst [vmem:[%s79 + $0x8] sm:$0xff] %v82
              $region44: #{custom-call.6} parent=38 // loop_footer
                %s77 = sadd.s32 1, %s73
              $region45: #{custom-call.6} parent=38 // loop_footer_branch
                %72 = sbr.rel target = $region41
              $region46: #{custom-call.6} parent=38 // loop_exit
                _
            $region39: #{custom-call.6} parent=23 // pred_fallthru
              _
            // Predicated region
            $region47: #{custom-call.6} parent=23 // pred_check
              _
            $region48: #{custom-call.6} parent=23 // pred_check_branch
              %85 = sbr.rel target = $region50
            $region49: #{custom-call.6} parent=23 // pred_region
              _
            $region50: #{custom-call.6} parent=23 // pred_fallthru
              _
          $region24: #{custom-call.6} parent=19 // pred_fallthru
            _
          // Predicated region
          $region25: #{custom-call.6} parent=19 // pred_check
            _
          $region26: #{custom-call.6} parent=19 // pred_check_branch
            %55 = sbr.rel target = $region28
          $region27: #{custom-call.6} parent=19 // pred_region
            %s57 = ssub.s32 256, 1
            loop: start=0, step=1, limit=1
            $region29: #{custom-call.6} parent=27 // loop_pre_header
              _
            $region30: #{custom-call.6} parent=27 // loop_header
              %s59 = sphi 0, %s63
              %p60 = scmp.ge.s32.totalorder %s59, 1
              %s64 = sphi %s49, %s49
              %s65 = sphi %s44, %s44
            $region31: #{custom-call.6} parent=27 // loop_header_branch
              %62 = sbr.rel (%p60) target = $region35
            $region32: #{custom-call.6} parent=27 // loop_body
              %v66 = vld [vmem:[%s64] sm:%s57]
              %67 = vst [vmem:[%s65] sm:%s57] %v66
              %v68 = vld [vmem:[%s64 + $0x8] sm:%s57]
              %69 = vst [vmem:[%s65 + $0x8] sm:%s57] %v68
            $region33: #{custom-call.6} parent=27 // loop_footer
              %s63 = sadd.s32 1, %s59
            $region34: #{custom-call.6} parent=27 // loop_footer_branch
              %58 = sbr.rel target = $region30
            $region35: #{custom-call.6} parent=27 // loop_exit
              _
          $region28: #{custom-call.6} parent=19 // pred_fallthru
            _
        $region20: #{custom-call.6} parent=15 // pred_fallthru
          _
        %86 = vnop
      $region16: #{custom-call.6} parent=5 // pred_fallthru
        _
      %p87 = scmp.le.s32.totalorder 1, %s3
      %p88 = scmp.lt.s32.totalorder %s3, 17
      %p89 = pnand %p87, %p88
      %p90 = pneg %p89
      // Predicated region
      $region51: #{custom-call.6} parent=5 // pred_check
        _
      $region52: #{custom-call.6} parent=5 // pred_check_branch
        %92 = sbr.rel (%p89) target = $region54
      $region53: #{custom-call.6} parent=5 // pred_region
        %s93 = ssub.s32 %s3, 1
        %s94 = sand.u32 %s8, 1
        %s95 = sand.u32 %s8, 1
        %s96 = smul.addr %s95, 16
        %s97 = scalar_lea.vmem [#allocation0], %s96
        %s98 = sand.u32 %s8, 1
        %s99 = sand.u32 %s8, 1
        %s100 = smul.addr %s99, 16
        %s101 = scalar_lea.vmem [#allocation0], %s100
        %s102 = sand.u32 %s8, 1
        %s103 = sand.u32 %s8, 1
        %s104 = smul.addr %s103, 16
        %s105 = scalar_lea.vmem [#allocation1], %s104
        %106 = vst [vmem:[%s105] sm:$0xff] 0.0
        %s107 = scalar_lea.vmem %s105, 8 [#allocation1]
        %108 = vst [vmem:[%s107] sm:$0xff] 0.0
        %vm109 = vcmask 7168
        %v110 = vld [vmem:[%s105] ss:$0 sm:$0xff]
        %v111 = vld [vmem:[%s97] ss:$0 sm:$0xff]
        %v112 = vmul.f32 %v110, %v110
        %113 = vadd.xlane.f32.xlu0 %v112
        %v114 = vpop.xlane.xlu0 %113
        %v115 = vsub.f32 %v111, %v114
        %v116 = vrsqrt.pop %v115
        %v117 = vmul.f32 %v116, %v115
        %v118 = vmul.f32 %v117, %v116
        %v119 = vmul.f32 0.5, %v118
        %v120 = vsub.f32 1.5, %v119
        %v121 = vmul.f32 %v116, %v120
        %vm122 = vweird.f32 %v115
        %vm123 = vweird.f32 %v116
        %vm124 = vmor %vm122, %vm123
        %v125 = vsel %vm124, %v116, %v121
        %v126 = vld [vmem:[%s97] sm:$0xff]
        %v127 = vld [vmem:[%s105] sm:$0xff]
        %v128 = vmul.f32 %v127, %v110
        %129 = vadd.xlane.f32.xlu0 %v128
        %v130 = vpop.xlane.xlu0 %129
        %v131 = vsub.f32 %v126, %v130
        %v132 = vmul.f32 %v131, %v125
        %v133 = vsel %vm109, %v132, 0.0
        %v134 = vadd.f32 %v127, %v133
        %135 = vst [vmem:[%s105] sm:$0xff] %v134
        %s136 = scalar_lea.vmem %s97, 8 [#allocation0]
        %v137 = vld [vmem:[%s136] sm:$0xff]
        %s138 = scalar_lea.vmem %s105, 8 [#allocation1]
        %v139 = vld [vmem:[%s138] sm:$0xff]
        %v140 = vmul.f32 %v139, %v110
        %141 = vadd.xlane.f32.xlu0 %v140
        %v142 = vpop.xlane.xlu0 %141
        %v143 = vsub.f32 %v137, %v142
        %v144 = vmul.f32 %v143, %v125
        %v145 = vsel %vm109, %v144, 0.0
        %v146 = vadd.f32 %v139, %v145
        %s147 = scalar_lea.vmem %s105, 8 [#allocation1]
        %148 = vst [vmem:[%s147] sm:$0xff] %v146
        %vm149 = vcmask 15368
        %s150 = scalar_lea.vmem %s105, 1 [#allocation1]
        %v151 = vld [vmem:[%s150] ss:$0 sm:$0xff]
        %s152 = scalar_lea.vmem %s97, 1 [#allocation0]
        %v153 = vld [vmem:[%s152] ss:$0 sm:$0xff]
        %v154 = vmul.f32 %v151, %v151
        %155 = vadd.xlane.f32.xlu0 %v154
        %v156 = vpop.xlane.xlu0 %155
        %v157 = vsub.f32 %v153, %v156
        %v158 = vrsqrt.pop %v157
        %v159 = vmul.f32 %v158, %v157
        %v160 = vmul.f32 %v159, %v158
        %v161 = vmul.f32 0.5, %v160
        %v162 = vsub.f32 1.5, %v161
        %v163 = vmul.f32 %v158, %v162
        %vm164 = vweird.f32 %v157
        %vm165 = vweird.f32 %v158
        %vm166 = vmor %vm164, %vm165
        %v167 = vsel %vm166, %v158, %v163
        %v168 = vld [vmem:[%s97] sm:$0xff]
        %v169 = vld [vmem:[%s105] sm:$0xff]
        %v170 = vmul.f32 %v169, %v151
        %171 = vadd.xlane.f32.xlu0 %v170
        %v172 = vpop.xlane.xlu0 %171
        %v173 = vsub.f32 %v168, %v172
        %v174 = vmul.f32 %v173, %v167
        %vm175 = vcmask 1047553
        %vm176 = vmand %vm149, %vm175
        %v177 = vsel %vm176, %v174, 0.0
        %v178 = vadd.f32 %v169, %v177
        %179 = vst [vmem:[%s105] sm:$0xff] %v178
        %s180 = scalar_lea.vmem %s97, 8 [#allocation0]
        %v181 = vld [vmem:[%s180] sm:$0xff]
        %s182 = scalar_lea.vmem %s105, 8 [#allocation1]
        %v183 = vld [vmem:[%s182] sm:$0xff]
        %v184 = vmul.f32 %v183, %v151
        %185 = vadd.xlane.f32.xlu0 %v184
        %v186 = vpop.xlane.xlu0 %185
        %v187 = vsub.f32 %v181, %v186
        %v188 = vmul.f32 %v187, %v167
        %v189 = vsel %vm149, %v188, 0.0
        %v190 = vadd.f32 %v183, %v189
        %s191 = scalar_lea.vmem %s105, 8 [#allocation1]
        %192 = vst [vmem:[%s191] sm:$0xff] %v190
        %vm193 = vcmask 23568
        %s194 = scalar_lea.vmem %s105, 2 [#allocation1]
        %v195 = vld [vmem:[%s194] ss:$0 sm:$0xff]
        %s196 = scalar_lea.vmem %s97, 2 [#allocation0]
        %v197 = vld [vmem:[%s196] ss:$0 sm:$0xff]
        %v198 = vmul.f32 %v195, %v195
        %199 = vadd.xlane.f32.xlu0 %v198
        %v200 = vpop.xlane.xlu0 %199
        %v201 = vsub.f32 %v197, %v200
        %v202 = vrsqrt.pop %v201
        %v203 = vmul.f32 %v202, %v201
        %v204 = vmul.f32 %v203, %v202
        %v205 = vmul.f32 0.5, %v204
        %v206 = vsub.f32 1.5, %v205
        %v207 = vmul.f32 %v202, %v206
        %vm208 = vweird.f32 %v201
        %vm209 = vweird.f32 %v202
        %vm210 = vmor %vm208, %vm209
        %v211 = vsel %vm210, %v202, %v207
        %v212 = vld [vmem:[%s97] sm:$0xff]
        %v213 = vld [vmem:[%s105] sm:$0xff]
        %v214 = vmul.f32 %v213, %v195
        %215 = vadd.xlane.f32.xlu0 %v214
        %v216 = vpop.xlane.xlu0 %215
        %v217 = vsub.f32 %v212, %v216
        %v218 = vmul.f32 %v217, %v211
        %vm219 = vcmask 1047554
        %vm220 = vmand %vm193, %vm219
        %v221 = vsel %vm220, %v218, 0.0
        %v222 = vadd.f32 %v213, %v221
        %223 = vst [vmem:[%s105] sm:$0xff] %v222
        %s224 = scalar_lea.vmem %s97, 8 [#allocation0]
        %v225 = vld [vmem:[%s224] sm:$0xff]
        %s226 = scalar_lea.vmem %s105, 8 [#allocation1]
        %v227 = vld [vmem:[%s226] sm:$0xff]
        %v228 = vmul.f32 %v227, %v195
        %229 = vadd.xlane.f32.xlu0 %v228
        %v230 = vpop.xlane.xlu0 %229
        %v231 = vsub.f32 %v225, %v230
        %v232 = vmul.f32 %v231, %v211
        %v233 = vsel %vm193, %v232, 0.0
        %v234 = vadd.f32 %v227, %v233
        %s235 = scalar_lea.vmem %s105, 8 [#allocation1]
        %236 = vst [vmem:[%s235] sm:$0xff] %v234
        %vm237 = vcmask 31768
        %s238 = scalar_lea.vmem %s105, 3 [#allocation1]
        %v239 = vld [vmem:[%s238] ss:$0 sm:$0xff]
        %s240 = scalar_lea.vmem %s97, 3 [#allocation0]
        %v241 = vld [vmem:[%s240] ss:$0 sm:$0xff]
        %v242 = vmul.f32 %v239, %v239
        %243 = vadd.xlane.f32.xlu0 %v242
        %v244 = vpop.xlane.xlu0 %243
        %v245 = vsub.f32 %v241, %v244
        %v246 = vrsqrt.pop %v245
        %v247 = vmul.f32 %v246, %v245
        %v248 = vmul.f32 %v247, %v246
        %v249 = vmul.f32 0.5, %v248
        %v250 = vsub.f32 1.5, %v249
        %v251 = vmul.f32 %v246, %v250
        %vm252 = vweird.f32 %v245
        %vm253 = vweird.f32 %v246
        %vm254 = vmor %vm252, %vm253
        %v255 = vsel %vm254, %v246, %v251
        %v256 = vld [vmem:[%s97] sm:$0xff]
        %v257 = vld [vmem:[%s105] sm:$0xff]
        %v258 = vmul.f32 %v257, %v239
        %259 = vadd.xlane.f32.xlu0 %v258
        %v260 = vpop.xlane.xlu0 %259
        %v261 = vsub.f32 %v256, %v260
        %v262 = vmul.f32 %v261, %v255
        %vm263 = vcmask 1047555
        %vm264 = vmand %vm237, %vm263
        %v265 = vsel %vm264, %v262, 0.0
        %v266 = vadd.f32 %v257, %v265
        %267 = vst [vmem:[%s105] sm:$0xff] %v266
        %s268 = scalar_lea.vmem %s97, 8 [#allocation0]
        %v269 = vld [vmem:[%s268] sm:$0xff]
        %s270 = scalar_lea.vmem %s105, 8 [#allocation1]
        %v271 = vld [vmem:[%s270] sm:$0xff]
        %v272 = vmul.f32 %v271, %v239
        %273 = vadd.xlane.f32.xlu0 %v272
        %v274 = vpop.xlane.xlu0 %273
        %v275 = vsub.f32 %v269, %v274
        %v276 = vmul.f32 %v275, %v255
        %v277 = vsel %vm237, %v276, 0.0
        %v278 = vadd.f32 %v271, %v277
        %s279 = scalar_lea.vmem %s105, 8 [#allocation1]
        %280 = vst [vmem:[%s279] sm:$0xff] %v278
        %vm281 = vcmask 39968
        %s282 = scalar_lea.vmem %s105, 4 [#allocation1]
        %v283 = vld [vmem:[%s282] ss:$0 sm:$0xff]
        %s284 = scalar_lea.vmem %s97, 4 [#allocation0]
        %v285 = vld [vmem:[%s284] ss:$0 sm:$0xff]
        %v286 = vmul.f32 %v283, %v283
        %287 = vadd.xlane.f32.xlu0 %v286
        %v288 = vpop.xlane.xlu0 %287
        %v289 = vsub.f32 %v285, %v288
        %v290 = vrsqrt.pop %v289
        %v291 = vmul.f32 %v290, %v289
        %v292 = vmul.f32 %v291, %v290
        %v293 = vmul.f32 0.5, %v292
        %v294 = vsub.f32 1.5, %v293
        %v295 = vmul.f32 %v290, %v294
        %vm296 = vweird.f32 %v289
        %vm297 = vweird.f32 %v290
        %vm298 = vmor %vm296, %vm297
        %v299 = vsel %vm298, %v290, %v295
        %v300 = vld [vmem:[%s97] sm:$0xff]
        %v301 = vld [vmem:[%s105] sm:$0xff]
        %v302 = vmul.f32 %v301, %v283
        %303 = vadd.xlane.f32.xlu0 %v302
        %v304 = vpop.xlane.xlu0 %303
        %v305 = vsub.f32 %v300, %v304
        %v306 = vmul.f32 %v305, %v299
        %vm307 = vcmask 1047556
        %vm308 = vmand %vm281, %vm307
        %v309 = vsel %vm308, %v306, 0.0
        %v310 = vadd.f32 %v301, %v309
        %311 = vst [vmem:[%s105] sm:$0xff] %v310
        %s312 = scalar_lea.vmem %s97, 8 [#allocation0]
        %v313 = vld [vmem:[%s312] sm:$0xff]
        %s314 = scalar_lea.vmem %s105, 8 [#allocation1]
        %v315 = vld [vmem:[%s314] sm:$0xff]
        %v316 = vmul.f32 %v315, %v283
        %317 = vadd.xlane.f32.xlu0 %v316
        %v318 = vpop.xlane.xlu0 %317
        %v319 = vsub.f32 %v313, %v318
        %v320 = vmul.f32 %v319, %v299
        %v321 = vsel %vm281, %v320, 0.0
        %v322 = vadd.f32 %v315, %v321
        %s323 = scalar_lea.vmem %s105, 8 [#allocation1]
        %324 = vst [vmem:[%s323] sm:$0xff] %v322
        %vm325 = vcmask 48168
        %s326 = scalar_lea.vmem %s105, 5 [#allocation1]
        %v327 = vld [vmem:[%s326] ss:$0 sm:$0xff]
        %s328 = scalar_lea.vmem %s97, 5 [#allocation0]
        %v329 = vld [vmem:[%s328] ss:$0 sm:$0xff]
        %v330 = vmul.f32 %v327, %v327
        %331 = vadd.xlane.f32.xlu0 %v330
        %v332 = vpop.xlane.xlu0 %331
        %v333 = vsub.f32 %v329, %v332
        %v334 = vrsqrt.pop %v333
        %v335 = vmul.f32 %v334, %v333
        %v336 = vmul.f32 %v335, %v334
        %v337 = vmul.f32 0.5, %v336
        %v338 = vsub.f32 1.5, %v337
        %v339 = vmul.f32 %v334, %v338
        %vm340 = vweird.f32 %v333
        %vm341 = vweird.f32 %v334
        %vm342 = vmor %vm340, %vm341
        %v343 = vsel %vm342, %v334, %v339
        %v344 = vld [vmem:[%s97] sm:$0xff]
        %v345 = vld [vmem:[%s105] sm:$0xff]
        %v346 = vmul.f32 %v345, %v327
        %347 = vadd.xlane.f32.xlu0 %v346
        %v348 = vpop.xlane.xlu0 %347
        %v349 = vsub.f32 %v344, %v348
        %v350 = vmul.f32 %v349, %v343
        %vm351 = vcmask 1047557
        %vm352 = vmand %vm325, %vm351
        %v353 = vsel %vm352, %v350, 0.0
        %v354 = vadd.f32 %v345, %v353
        %355 = vst [vmem:[%s105] sm:$0xff] %v354
        %s356 = scalar_lea.vmem %s97, 8 [#allocation0]
        %v357 = vld [vmem:[%s356] sm:$0xff]
        %s358 = scalar_lea.vmem %s105, 8 [#allocation1]
        %v359 = vld [vmem:[%s358] sm:$0xff]
        %v360 = vmul.f32 %v359, %v327
        %361 = vadd.xlane.f32.xlu0 %v360
        %v362 = vpop.xlane.xlu0 %361
        %v363 = vsub.f32 %v357, %v362
        %v364 = vmul.f32 %v363, %v343
        %v365 = vsel %vm325, %v364, 0.0
        %v366 = vadd.f32 %v359, %v365
        %s367 = scalar_lea.vmem %s105, 8 [#allocation1]
        %368 = vst [vmem:[%s367] sm:$0xff] %v366
        %vm369 = vcmask 56368
        %s370 = scalar_lea.vmem %s105, 6 [#allocation1]
        %v371 = vld [vmem:[%s370] ss:$0 sm:$0xff]
        %s372 = scalar_lea.vmem %s97, 6 [#allocation0]
        %v373 = vld [vmem:[%s372] ss:$0 sm:$0xff]
        %v374 = vmul.f32 %v371, %v371
        %375 = vadd.xlane.f32.xlu0 %v374
        %v376 = vpop.xlane.xlu0 %375
        %v377 = vsub.f32 %v373, %v376
        %v378 = vrsqrt.pop %v377
        %v379 = vmul.f32 %v378, %v377
        %v380 = vmul.f32 %v379, %v378
        %v381 = vmul.f32 0.5, %v380
        %v382 = vsub.f32 1.5, %v381
        %v383 = vmul.f32 %v378, %v382
        %vm384 = vweird.f32 %v377
        %vm385 = vweird.f32 %v378
        %vm386 = vmor %vm384, %vm385
        %v387 = vsel %vm386, %v378, %v383
        %v388 = vld [vmem:[%s97] sm:$0xff]
        %v389 = vld [vmem:[%s105] sm:$0xff]
        %v390 = vmul.f32 %v389, %v371
        %391 = vadd.xlane.f32.xlu0 %v390
        %v392 = vpop.xlane.xlu0 %391
        %v393 = vsub.f32 %v388, %v392
        %v394 = vmul.f32 %v393, %v387
        %vm395 = vcmask 1047558
        %vm396 = vmand %vm369, %vm395
        %v397 = vsel %vm396, %v394, 0.0
        %v398 = vadd.f32 %v389, %v397
        %399 = vst [vmem:[%s105] sm:$0xff] %v398
        %s400 = scalar_lea.vmem %s97, 8 [#allocation0]
        %v401 = vld [vmem:[%s400] sm:$0xff]
        %s402 = scalar_lea.vmem %s105, 8 [#allocation1]
        %v403 = vld [vmem:[%s402] sm:$0xff]
        %v404 = vmul.f32 %v403, %v371
        %405 = vadd.xlane.f32.xlu0 %v404
        %v406 = vpop.xlane.xlu0 %405
        %v407 = vsub.f32 %v401, %v406
        %v408 = vmul.f32 %v407, %v387
        %v409 = vsel %vm369, %v408, 0.0
        %v410 = vadd.f32 %v403, %v409
        %s411 = scalar_lea.vmem %s105, 8 [#allocation1]
        %412 = vst [vmem:[%s411] sm:$0xff] %v410
        %vm413 = vcmask 64568
        %s414 = scalar_lea.vmem %s105, 7 [#allocation1]
        %v415 = vld [vmem:[%s414] ss:$0 sm:$0xff]
        %s416 = scalar_lea.vmem %s97, 7 [#allocation0]
        %v417 = vld [vmem:[%s416] ss:$0 sm:$0xff]
        %v418 = vmul.f32 %v415, %v415
        %419 = vadd.xlane.f32.xlu0 %v418
        %v420 = vpop.xlane.xlu0 %419
        %v421 = vsub.f32 %v417, %v420
        %v422 = vrsqrt.pop %v421
        %v423 = vmul.f32 %v422, %v421
        %v424 = vmul.f32 %v423, %v422
        %v425 = vmul.f32 0.5, %v424
        %v426 = vsub.f32 1.5, %v425
        %v427 = vmul.f32 %v422, %v426
        %vm428 = vweird.f32 %v421
        %vm429 = vweird.f32 %v422
        %vm430 = vmor %vm428, %vm429
        %v431 = vsel %vm430, %v422, %v427
        %v432 = vld [vmem:[%s97] sm:$0xff]
        %v433 = vld [vmem:[%s105] sm:$0xff]
        %v434 = vmul.f32 %v433, %v415
        %435 = vadd.xlane.f32.xlu0 %v434
        %v436 = vpop.xlane.xlu0 %435
        %v437 = vsub.f32 %v432, %v436
        %v438 = vmul.f32 %v437, %v431
        %vm439 = vcmask 1047559
        %vm440 = vmand %vm413, %vm439
        %v441 = vsel %vm440, %v438, 0.0
        %v442 = vadd.f32 %v433, %v441
        %443 = vst [vmem:[%s105] sm:$0xff] %v442
        %s444 = scalar_lea.vmem %s97, 8 [#allocation0]
        %v445 = vld [vmem:[%s444] sm:$0xff]
        %s446 = scalar_lea.vmem %s105, 8 [#allocation1]
        %v447 = vld [vmem:[%s446] sm:$0xff]
        %v448 = vmul.f32 %v447, %v415
        %449 = vadd.xlane.f32.xlu0 %v448
        %v450 = vpop.xlane.xlu0 %449
        %v451 = vsub.f32 %v445, %v450
        %v452 = vmul.f32 %v451, %v431
        %v453 = vsel %vm413, %v452, 0.0
        %v454 = vadd.f32 %v447, %v453
        %s455 = scalar_lea.vmem %s105, 8 [#allocation1]
        %456 = vst [vmem:[%s455] sm:$0xff] %v454
        %vm457 = vcmask 72768
        %s458 = scalar_lea.vmem %s105, 8 [#allocation1]
        %v459 = vld [vmem:[%s458] ss:$0 sm:$0xff]
        %s460 = scalar_lea.vmem %s97, 8 [#allocation0]
        %v461 = vld [vmem:[%s460] ss:$0 sm:$0xff]
        %v462 = vmul.f32 %v459, %v459
        %463 = vadd.xlane.f32.xlu0 %v462
        %v464 = vpop.xlane.xlu0 %463
        %v465 = vsub.f32 %v461, %v464
        %v466 = vrsqrt.pop %v465
        %v467 = vmul.f32 %v466, %v465
        %v468 = vmul.f32 %v467, %v466
        %v469 = vmul.f32 0.5, %v468
        %v470 = vsub.f32 1.5, %v469
        %v471 = vmul.f32 %v466, %v470
        %vm472 = vweird.f32 %v465
        %vm473 = vweird.f32 %v466
        %vm474 = vmor %vm472, %vm473
        %v475 = vsel %vm474, %v466, %v471
        %s476 = scalar_lea.vmem %s97, 8 [#allocation0]
        %v477 = vld [vmem:[%s476] sm:$0xff]
        %s478 = scalar_lea.vmem %s105, 8 [#allocation1]
        %v479 = vld [vmem:[%s478] sm:$0xff]
        %v480 = vmul.f32 %v479, %v459
        %481 = vadd.xlane.f32.xlu0 %v480
        %v482 = vpop.xlane.xlu0 %481
        %v483 = vsub.f32 %v477, %v482
        %v484 = vmul.f32 %v483, %v475
        %v485 = vsel %vm457, %v484, 0.0
        %v486 = vadd.f32 %v479, %v485
        %s487 = scalar_lea.vmem %s105, 8 [#allocation1]
        %488 = vst [vmem:[%s487] sm:$0xff] %v486
        %vm489 = vcmask 80968
        %s490 = scalar_lea.vmem %s105, 9 [#allocation1]
        %v491 = vld [vmem:[%s490] ss:$0 sm:$0xff]
        %s492 = scalar_lea.vmem %s97, 9 [#allocation0]
        %v493 = vld [vmem:[%s492] ss:$0 sm:$0xff]
        %v494 = vmul.f32 %v491, %v491
        %495 = vadd.xlane.f32.xlu0 %v494
        %v496 = vpop.xlane.xlu0 %495
        %v497 = vsub.f32 %v493, %v496
        %v498 = vrsqrt.pop %v497
        %v499 = vmul.f32 %v498, %v497
        %v500 = vmul.f32 %v499, %v498
        %v501 = vmul.f32 0.5, %v500
        %v502 = vsub.f32 1.5, %v501
        %v503 = vmul.f32 %v498, %v502
        %vm504 = vweird.f32 %v497
        %vm505 = vweird.f32 %v498
        %vm506 = vmor %vm504, %vm505
        %v507 = vsel %vm506, %v498, %v503
        %s508 = scalar_lea.vmem %s97, 8 [#allocation0]
        %v509 = vld [vmem:[%s508] sm:$0xff]
        %s510 = scalar_lea.vmem %s105, 8 [#allocation1]
        %v511 = vld [vmem:[%s510] sm:$0xff]
        %v512 = vmul.f32 %v511, %v491
        %513 = vadd.xlane.f32.xlu0 %v512
        %v514 = vpop.xlane.xlu0 %513
        %v515 = vsub.f32 %v509, %v514
        %v516 = vmul.f32 %v515, %v507
        %vm517 = vcmask 1047553
        %vm518 = vmand %vm489, %vm517
        %v519 = vsel %vm518, %v516, 0.0
        %v520 = vadd.f32 %v511, %v519
        %s521 = scalar_lea.vmem %s105, 8 [#allocation1]
        %522 = vst [vmem:[%s521] sm:$0xff] %v520
        %vm523 = vcmask 89168
        %s524 = scalar_lea.vmem %s105, 10 [#allocation1]
        %v525 = vld [vmem:[%s524] ss:$0 sm:$0xff]
        %s526 = scalar_lea.vmem %s97, 10 [#allocation0]
        %v527 = vld [vmem:[%s526] ss:$0 sm:$0xff]
        %v528 = vmul.f32 %v525, %v525
        %529 = vadd.xlane.f32.xlu0 %v528
        %v530 = vpop.xlane.xlu0 %529
        %v531 = vsub.f32 %v527, %v530
        %v532 = vrsqrt.pop %v531
        %v533 = vmul.f32 %v532, %v531
        %v534 = vmul.f32 %v533, %v532
        %v535 = vmul.f32 0.5, %v534
        %v536 = vsub.f32 1.5, %v535
        %v537 = vmul.f32 %v532, %v536
        %vm538 = vweird.f32 %v531
        %vm539 = vweird.f32 %v532
        %vm540 = vmor %vm538, %vm539
        %v541 = vsel %vm540, %v532, %v537
        %s542 = scalar_lea.vmem %s97, 8 [#allocation0]
        %v543 = vld [vmem:[%s542] sm:$0xff]
        %s544 = scalar_lea.vmem %s105, 8 [#allocation1]
        %v545 = vld [vmem:[%s544] sm:$0xff]
        %v546 = vmul.f32 %v545, %v525
        %547 = vadd.xlane.f32.xlu0 %v546
        %v548 = vpop.xlane.xlu0 %547
        %v549 = vsub.f32 %v543, %v548
        %v550 = vmul.f32 %v549, %v541
        %vm551 = vcmask 1047554
        %vm552 = vmand %vm523, %vm551
        %v553 = vsel %vm552, %v550, 0.0
        %v554 = vadd.f32 %v545, %v553
        %s555 = scalar_lea.vmem %s105, 8 [#allocation1]
        %556 = vst [vmem:[%s555] sm:$0xff] %v554
        %vm557 = vcmask 97368
        %s558 = scalar_lea.vmem %s105, 11 [#allocation1]
        %v559 = vld [vmem:[%s558] ss:$0 sm:$0xff]
        %s560 = scalar_lea.vmem %s97, 11 [#allocation0]
        %v561 = vld [vmem:[%s560] ss:$0 sm:$0xff]
        %v562 = vmul.f32 %v559, %v559
        %563 = vadd.xlane.f32.xlu0 %v562
        %v564 = vpop.xlane.xlu0 %563
        %v565 = vsub.f32 %v561, %v564
        %v566 = vrsqrt.pop %v565
        %v567 = vmul.f32 %v566, %v565
        %v568 = vmul.f32 %v567, %v566
        %v569 = vmul.f32 0.5, %v568
        %v570 = vsub.f32 1.5, %v569
        %v571 = vmul.f32 %v566, %v570
        %vm572 = vweird.f32 %v565
        %vm573 = vweird.f32 %v566
        %vm574 = vmor %vm572, %vm573
        %v575 = vsel %vm574, %v566, %v571
        %s576 = scalar_lea.vmem %s97, 8 [#allocation0]
        %v577 = vld [vmem:[%s576] sm:$0xff]
        %s578 = scalar_lea.vmem %s105, 8 [#allocation1]
        %v579 = vld [vmem:[%s578] sm:$0xff]
        %v580 = vmul.f32 %v579, %v559
        %581 = vadd.xlane.f32.xlu0 %v580
        %v582 = vpop.xlane.xlu0 %581
        %v583 = vsub.f32 %v577, %v582
        %v584 = vmul.f32 %v583, %v575
        %vm585 = vcmask 1047555
        %vm586 = vmand %vm557, %vm585
        %v587 = vsel %vm586, %v584, 0.0
        %v588 = vadd.f32 %v579, %v587
        %s589 = scalar_lea.vmem %s105, 8 [#allocation1]
        %590 = vst [vmem:[%s589] sm:$0xff] %v588
        %vm591 = vcmask 105568
        %s592 = scalar_lea.vmem %s105, 12 [#allocation1]
        %v593 = vld [vmem:[%s592] ss:$0 sm:$0xff]
        %s594 = scalar_lea.vmem %s97, 12 [#allocation0]
        %v595 = vld [vmem:[%s594] ss:$0 sm:$0xff]
        %v596 = vmul.f32 %v593, %v593
        %597 = vadd.xlane.f32.xlu0 %v596
        %v598 = vpop.xlane.xlu0 %597
        %v599 = vsub.f32 %v595, %v598
        %v600 = vrsqrt.pop %v599
        %v601 = vmul.f32 %v600, %v599
        %v602 = vmul.f32 %v601, %v600
        %v603 = vmul.f32 0.5, %v602
        %v604 = vsub.f32 1.5, %v603
        %v605 = vmul.f32 %v600, %v604
        %vm606 = vweird.f32 %v599
        %vm607 = vweird.f32 %v600
        %vm608 = vmor %vm606, %vm607
        %v609 = vsel %vm608, %v600, %v605
        %s610 = scalar_lea.vmem %s97, 8 [#allocation0]
        %v611 = vld [vmem:[%s610] sm:$0xff]
        %s612 = scalar_lea.vmem %s105, 8 [#allocation1]
        %v613 = vld [vmem:[%s612] sm:$0xff]
        %v614 = vmul.f32 %v613, %v593
        %615 = vadd.xlane.f32.xlu0 %v614
        %v616 = vpop.xlane.xlu0 %615
        %v617 = vsub.f32 %v611, %v616
        %v618 = vmul.f32 %v617, %v609
        %vm619 = vcmask 1047556
        %vm620 = vmand %vm591, %vm619
        %v621 = vsel %vm620, %v618, 0.0
        %v622 = vadd.f32 %v613, %v621
        %s623 = scalar_lea.vmem %s105, 8 [#allocation1]
        %624 = vst [vmem:[%s623] sm:$0xff] %v622
        %vm625 = vcmask 113768
        %s626 = scalar_lea.vmem %s105, 13 [#allocation1]
        %v627 = vld [vmem:[%s626] ss:$0 sm:$0xff]
        %s628 = scalar_lea.vmem %s97, 13 [#allocation0]
        %v629 = vld [vmem:[%s628] ss:$0 sm:$0xff]
        %v630 = vmul.f32 %v627, %v627
        %631 = vadd.xlane.f32.xlu0 %v630
        %v632 = vpop.xlane.xlu0 %631
        %v633 = vsub.f32 %v629, %v632
        %v634 = vrsqrt.pop %v633
        %v635 = vmul.f32 %v634, %v633
        %v636 = vmul.f32 %v635, %v634
        %v637 = vmul.f32 0.5, %v636
        %v638 = vsub.f32 1.5, %v637
        %v639 = vmul.f32 %v634, %v638
        %vm640 = vweird.f32 %v633
        %vm641 = vweird.f32 %v634
        %vm642 = vmor %vm640, %vm641
        %v643 = vsel %vm642, %v634, %v639
        %s644 = scalar_lea.vmem %s97, 8 [#allocation0]
        %v645 = vld [vmem:[%s644] sm:$0xff]
        %s646 = scalar_lea.vmem %s105, 8 [#allocation1]
        %v647 = vld [vmem:[%s646] sm:$0xff]
        %v648 = vmul.f32 %v647, %v627
        %649 = vadd.xlane.f32.xlu0 %v648
        %v650 = vpop.xlane.xlu0 %649
        %v651 = vsub.f32 %v645, %v650
        %v652 = vmul.f32 %v651, %v643
        %vm653 = vcmask 1047557
        %vm654 = vmand %vm625, %vm653
        %v655 = vsel %vm654, %v652, 0.0
        %v656 = vadd.f32 %v647, %v655
        %s657 = scalar_lea.vmem %s105, 8 [#allocation1]
        %658 = vst [vmem:[%s657] sm:$0xff] %v656
        %vm659 = vcmask 121968
        %s660 = scalar_lea.vmem %s105, 14 [#allocation1]
        %v661 = vld [vmem:[%s660] ss:$0 sm:$0xff]
        %s662 = scalar_lea.vmem %s97, 14 [#allocation0]
        %v663 = vld [vmem:[%s662] ss:$0 sm:$0xff]
        %v664 = vmul.f32 %v661, %v661
        %665 = vadd.xlane.f32.xlu0 %v664
        %v666 = vpop.xlane.xlu0 %665
        %v667 = vsub.f32 %v663, %v666
        %v668 = vrsqrt.pop %v667
        %v669 = vmul.f32 %v668, %v667
        %v670 = vmul.f32 %v669, %v668
        %v671 = vmul.f32 0.5, %v670
        %v672 = vsub.f32 1.5, %v671
        %v673 = vmul.f32 %v668, %v672
        %vm674 = vweird.f32 %v667
        %vm675 = vweird.f32 %v668
        %vm676 = vmor %vm674, %vm675
        %v677 = vsel %vm676, %v668, %v673
        %s678 = scalar_lea.vmem %s97, 8 [#allocation0]
        %v679 = vld [vmem:[%s678] sm:$0xff]
        %s680 = scalar_lea.vmem %s105, 8 [#allocation1]
        %v681 = vld [vmem:[%s680] sm:$0xff]
        %v682 = vmul.f32 %v681, %v661
        %683 = vadd.xlane.f32.xlu0 %v682
        %v684 = vpop.xlane.xlu0 %683
        %v685 = vsub.f32 %v679, %v684
        %v686 = vmul.f32 %v685, %v677
        %vm687 = vcmask 1047558
        %vm688 = vmand %vm659, %vm687
        %v689 = vsel %vm688, %v686, 0.0
        %v690 = vadd.f32 %v681, %v689
        %s691 = scalar_lea.vmem %s105, 8 [#allocation1]
        %692 = vst [vmem:[%s691] sm:$0xff] %v690
        %vm693 = vcmask 130168
        %s694 = scalar_lea.vmem %s105, 15 [#allocation1]
        %v695 = vld [vmem:[%s694] ss:$0 sm:$0xff]
        %s696 = scalar_lea.vmem %s97, 15 [#allocation0]
        %v697 = vld [vmem:[%s696] ss:$0 sm:$0xff]
        %v698 = vmul.f32 %v695, %v695
        %699 = vadd.xlane.f32.xlu0 %v698
        %v700 = vpop.xlane.xlu0 %699
        %v701 = vsub.f32 %v697, %v700
        %v702 = vrsqrt.pop %v701
        %v703 = vmul.f32 %v702, %v701
        %v704 = vmul.f32 %v703, %v702
        %v705 = vmul.f32 0.5, %v704
        %v706 = vsub.f32 1.5, %v705
        %v707 = vmul.f32 %v702, %v706
        %vm708 = vweird.f32 %v701
        %vm709 = vweird.f32 %v702
        %vm710 = vmor %vm708, %vm709
        %v711 = vsel %vm710, %v702, %v707
        %s712 = scalar_lea.vmem %s97, 8 [#allocation0]
        %v713 = vld [vmem:[%s712] sm:$0xff]
        %s714 = scalar_lea.vmem %s105, 8 [#allocation1]
        %v715 = vld [vmem:[%s714] sm:$0xff]
        %v716 = vmul.f32 %v715, %v695
        %717 = vadd.xlane.f32.xlu0 %v716
        %v718 = vpop.xlane.xlu0 %717
        %v719 = vsub.f32 %v713, %v718
        %v720 = vmul.f32 %v719, %v711
        %vm721 = vcmask 1047559
        %vm722 = vmand %vm693, %vm721
        %v723 = vsel %vm722, %v720, 0.0
        %v724 = vadd.f32 %v715, %v723
        %s725 = scalar_lea.vmem %s105, 8 [#allocation1]
        %726 = vst [vmem:[%s725] sm:$0xff] %v724
        %s727 = sand.u32 %s8, 1
        %s728 = sand.u32 %s8, 1
        %s729 = smul.addr %s728, 16
        %s730 = scalar_lea.vmem [#allocation1], %s729
        %s731 = sadd.s32 %s15, %s14
        %s732 = smul.addr %s13, 2
        %s733 = sadd.s32 %s731, %s732
        %s734 = smul.addr %s733, 8
        %s735 = scalar_lea.vmem %s1, %s734
        // Predicated region
        $region55: #{custom-call.6} parent=53 // pred_check
          _
        $region56: #{custom-call.6} parent=53 // pred_check_branch
          %737 = sbr.rel (0) target = $region58
        $region57: #{custom-call.6} parent=53 // pred_region
          // Predicated region
          $region59: #{custom-call.6} parent=57 // pred_check
            _
          $region60: #{custom-call.6} parent=57 // pred_check_branch
            %739 = sbr.rel (0) target = $region62
          $region61: #{custom-call.6} parent=57 // pred_region
            // Predicated region
            $region74: #{custom-call.6} parent=61 // pred_check
              _
            $region75: #{custom-call.6} parent=61 // pred_check_branch
              %757 = sbr.rel (0) target = $region77
            $region76: #{custom-call.6} parent=61 // pred_region
              loop: start=0, step=1, limit=1
              $region78: #{custom-call.6} parent=76 // loop_pre_header
                _
              $region79: #{custom-call.6} parent=76 // loop_header
                %s759 = sphi 0, %s763
                %p760 = scmp.ge.s32.totalorder %s759, 1
                %s764 = sphi %s730, %s730
                %s765 = sphi %s735, %s735
              $region80: #{custom-call.6} parent=76 // loop_header_branch
                %762 = sbr.rel (%p760) target = $region84
              $region81: #{custom-call.6} parent=76 // loop_body
                %v766 = vld [vmem:[%s764] sm:$0xff]
                %767 = vst [vmem:[%s765] sm:$0xff] %v766
                %v768 = vld [vmem:[%s764 + $0x8] sm:$0xff]
                %769 = vst [vmem:[%s765 + $0x8] sm:$0xff] %v768
              $region82: #{custom-call.6} parent=76 // loop_footer
                %s763 = sadd.s32 1, %s759
              $region83: #{custom-call.6} parent=76 // loop_footer_branch
                %758 = sbr.rel target = $region79
              $region84: #{custom-call.6} parent=76 // loop_exit
                _
            $region77: #{custom-call.6} parent=61 // pred_fallthru
              _
            // Predicated region
            $region85: #{custom-call.6} parent=61 // pred_check
              _
            $region86: #{custom-call.6} parent=61 // pred_check_branch
              %771 = sbr.rel target = $region88
            $region87: #{custom-call.6} parent=61 // pred_region
              _
            $region88: #{custom-call.6} parent=61 // pred_fallthru
              _
          $region62: #{custom-call.6} parent=57 // pred_fallthru
            _
          // Predicated region
          $region63: #{custom-call.6} parent=57 // pred_check
            _
          $region64: #{custom-call.6} parent=57 // pred_check_branch
            %741 = sbr.rel target = $region66
          $region65: #{custom-call.6} parent=57 // pred_region
            %s743 = ssub.s32 256, 1
            loop: start=0, step=1, limit=1
            $region67: #{custom-call.6} parent=65 // loop_pre_header
              _
            $region68: #{custom-call.6} parent=65 // loop_header
              %s745 = sphi 0, %s749
              %p746 = scmp.ge.s32.totalorder %s745, 1
              %s750 = sphi %s730, %s730
              %s751 = sphi %s735, %s735
            $region69: #{custom-call.6} parent=65 // loop_header_branch
              %748 = sbr.rel (%p746) target = $region73
            $region70: #{custom-call.6} parent=65 // loop_body
              %v752 = vld [vmem:[%s750] sm:%s743]
              %753 = vst [vmem:[%s751] sm:%s743] %v752
              %v754 = vld [vmem:[%s750 + $0x8] sm:%s743]
              %755 = vst [vmem:[%s751 + $0x8] sm:%s743] %v754
            $region71: #{custom-call.6} parent=65 // loop_footer
              %s749 = sadd.s32 1, %s745
            $region72: #{custom-call.6} parent=65 // loop_footer_branch
              %744 = sbr.rel target = $region68
            $region73: #{custom-call.6} parent=65 // loop_exit
              _
          $region66: #{custom-call.6} parent=57 // pred_fallthru
            _
        $region58: #{custom-call.6} parent=53 // pred_fallthru
          _
        %772 = vnop
      $region54: #{custom-call.6} parent=5 // pred_fallthru
        _
      %p773 = scmp.le.s32.totalorder 2, %s3
      // Predicated region
      $region89: #{custom-call.6} parent=5 // pred_check
        %p774 = pneg %p773
      $region90: #{custom-call.6} parent=5 // pred_check_branch
        %776 = sbr.rel (%p774) target = $region92
      $region91: #{custom-call.6} parent=5 // pred_region
        %s777 = ssub.s32 %s3, 2
        %s778 = sand.u32 %s9, 1
        %s779 = sand.u32 %s9, 1
        %s780 = smul.addr %s779, 16
        %s781 = scalar_lea.vmem [#allocation1], %s780
      $region92: #{custom-call.6} parent=5 // pred_fallthru
        _
    $region6: #{custom-call.6} parent=1 // loop_footer
      %s7 = sadd.s32 1, %s3
    $region7: #{custom-call.6} parent=1 // loop_footer_branch
      %2 = sbr.rel target = $region3
    $region8: #{custom-call.6} parent=1 // loop_exit
      _

// kernel: custom-call.7
$region0: #{custom-call.7}
  %s0 = inlined_call_operand.vmem [shape: f32[16,1,16,16], index: 0, kind: input, shape index: {}]
  %s1 = inlined_call_operand.vmem [shape: f32[16,1,16,16], index: 1, kind: output, shape index: {}]
  $region1: #{custom-call.7} parent=0
    #allocation0 [shape = 'u8[16384]{0}', space=vmem, size = 0x4000, scoped, tag = 'operand span for operand 0']
    #allocation1 [shape = 'u8[16384]{0}', space=vmem, size = 0x4000, scoped, tag = 'operand span for operand 1']
    loop: start=0, step=1, limit=18
    $region2: #{custom-call.7} parent=1 // loop_pre_header
      _
    $region3: #{custom-call.7} parent=1 // loop_header
      %s3 = sphi 0, %s7
      %p4 = scmp.ge.s32.totalorder %s3, 18
      %s10 = sphi 0, %s36
      %s11 = sphi 0, %s32
      %s12 = sphi 0, %s28
      %s13 = sphi 0, %s24
      %s14 = sphi 0, %s10
      %s15 = sphi 0, %s11
      %s16 = sphi 0, %s12
      %s17 = sphi 0, %s13
      %s18 = sphi 0, %s14
      %s19 = sphi 0, %s15
      %s20 = sphi 0, %s16
      %s21 = sphi 0, %s17
    $region4: #{custom-call.7} parent=1 // loop_header_branch
      %6 = sbr.rel (%p4) target = $region8
    $region5: #{custom-call.7} parent=1 // loop_body
      %s8 = ssub.s32 %s3, 1
      %s9 = ssub.s32 %s3, 2
      %s22 = sadd.s32 1, %s13
      %p23 = scmp.ge.s32.totalorder %s22, 1
      %s24 = scalar_select %p23, 0, %s22
      %s25 = sadd.s32 1, %s12
      %s26 = scalar_select %p23, %s25, %s12
      %p27 = scmp.ge.s32.totalorder %s26, 1
      %s28 = scalar_select %p27, 0, %s26
      %s29 = sadd.s32 1, %s11
      %s30 = scalar_select %p27, %s29, %s11
      %p31 = scmp.ge.s32.totalorder %s30, 1
      %s32 = scalar_select %p31, 0, %s30
      %s33 = sadd.s32 1, %s10
      %s34 = scalar_select %p31, %s33, %s10
      %p35 = scmp.ge.s32.totalorder %s34, 16
      %s36 = scalar_select %p35, 0, %s34
      %p37 = scmp.le.s32.totalorder 1, %s3
      %p38 = scmp.lt.s32.totalorder %s3, 17
      %p39 = pnand %p37, %p38
      %p40 = pneg %p39
      // Predicated region
      $region9: #{custom-call.7} parent=5 // pred_check
        _
      $region10: #{custom-call.7} parent=5 // pred_check_branch
        %42 = sbr.rel (%p39) target = $region12
      $region11: #{custom-call.7} parent=5 // pred_region
        %s43 = ssub.s32 %s3, 1
      $region12: #{custom-call.7} parent=5 // pred_fallthru
        _
      %p44 = scmp.lt.s32.totalorder %s3, 16
      // Predicated region
      $region13: #{custom-call.7} parent=5 // pred_check
        %p45 = pneg %p44
      $region14: #{custom-call.7} parent=5 // pred_check_branch
        %47 = sbr.rel (%p45) target = $region16
      $region15: #{custom-call.7} parent=5 // pred_region
        %s48 = sand.u32 %s3, 1
        %s49 = sand.u32 %s3, 1
        %s50 = smul.addr %s49, 16
        %s51 = scalar_lea.vmem [#allocation0], %s50
        %s52 = sadd.s32 %s13, %s12
        %s53 = smul.addr %s11, 2
        %s54 = sadd.s32 %s52, %s53
        %s55 = smul.addr %s10, 2
        %s56 = sadd.s32 %s54, %s55
        %s57 = smul.addr %s56, 8
        %s58 = scalar_lea.vmem %s0, %s57
        // Predicated region
        $region17: #{custom-call.7} parent=15 // pred_check
          _
        $region18: #{custom-call.7} parent=15 // pred_check_branch
          %60 = sbr.rel (0) target = $region20
        $region19: #{custom-call.7} parent=15 // pred_region
          // Predicated region
          $region21: #{custom-call.7} parent=19 // pred_check
            _
          $region22: #{custom-call.7} parent=19 // pred_check_branch
            %62 = sbr.rel (0) target = $region24
          $region23: #{custom-call.7} parent=19 // pred_region
            // Predicated region
            $region36: #{custom-call.7} parent=23 // pred_check
              _
            $region37: #{custom-call.7} parent=23 // pred_check_branch
              %80 = sbr.rel (0) target = $region39
            $region38: #{custom-call.7} parent=23 // pred_region
              loop: start=0, step=1, limit=1
              $region40: #{custom-call.7} parent=38 // loop_pre_header
                _
              $region41: #{custom-call.7} parent=38 // loop_header
                %s82 = sphi 0, %s86
                %p83 = scmp.ge.s32.totalorder %s82, 1
                %s87 = sphi %s58, %s58
                %s88 = sphi %s51, %s51
              $region42: #{custom-call.7} parent=38 // loop_header_branch
                %85 = sbr.rel (%p83) target = $region46
              $region43: #{custom-call.7} parent=38 // loop_body
                %v89 = vld [vmem:[%s87] sm:$0xff]
                %90 = vst [vmem:[%s88] sm:$0xff] %v89
                %v91 = vld [vmem:[%s87 + $0x8] sm:$0xff]
                %92 = vst [vmem:[%s88 + $0x8] sm:$0xff] %v91
              $region44: #{custom-call.7} parent=38 // loop_footer
                %s86 = sadd.s32 1, %s82
              $region45: #{custom-call.7} parent=38 // loop_footer_branch
                %81 = sbr.rel target = $region41
              $region46: #{custom-call.7} parent=38 // loop_exit
                _
            $region39: #{custom-call.7} parent=23 // pred_fallthru
              _
            // Predicated region
            $region47: #{custom-call.7} parent=23 // pred_check
              _
            $region48: #{custom-call.7} parent=23 // pred_check_branch
              %94 = sbr.rel target = $region50
            $region49: #{custom-call.7} parent=23 // pred_region
              _
            $region50: #{custom-call.7} parent=23 // pred_fallthru
              _
          $region24: #{custom-call.7} parent=19 // pred_fallthru
            _
          // Predicated region
          $region25: #{custom-call.7} parent=19 // pred_check
            _
          $region26: #{custom-call.7} parent=19 // pred_check_branch
            %64 = sbr.rel target = $region28
          $region27: #{custom-call.7} parent=19 // pred_region
            %s66 = ssub.s32 256, 1
            loop: start=0, step=1, limit=1
            $region29: #{custom-call.7} parent=27 // loop_pre_header
              _
            $region30: #{custom-call.7} parent=27 // loop_header
              %s68 = sphi 0, %s72
              %p69 = scmp.ge.s32.totalorder %s68, 1
              %s73 = sphi %s58, %s58
              %s74 = sphi %s51, %s51
            $region31: #{custom-call.7} parent=27 // loop_header_branch
              %71 = sbr.rel (%p69) target = $region35
            $region32: #{custom-call.7} parent=27 // loop_body
              %v75 = vld [vmem:[%s73] sm:%s66]
              %76 = vst [vmem:[%s74] sm:%s66] %v75
              %v77 = vld [vmem:[%s73 + $0x8] sm:%s66]
              %78 = vst [vmem:[%s74 + $0x8] sm:%s66] %v77
            $region33: #{custom-call.7} parent=27 // loop_footer
              %s72 = sadd.s32 1, %s68
            $region34: #{custom-call.7} parent=27 // loop_footer_branch
              %67 = sbr.rel target = $region30
            $region35: #{custom-call.7} parent=27 // loop_exit
              _
          $region28: #{custom-call.7} parent=19 // pred_fallthru
            _
        $region20: #{custom-call.7} parent=15 // pred_fallthru
          _
        %95 = vnop
      $region16: #{custom-call.7} parent=5 // pred_fallthru
        _
      %p96 = scmp.le.s32.totalorder 1, %s3
      %p97 = scmp.lt.s32.totalorder %s3, 17
      %p98 = pnand %p96, %p97
      %p99 = pneg %p98
      // Predicated region
      $region51: #{custom-call.7} parent=5 // pred_check
        _
      $region52: #{custom-call.7} parent=5 // pred_check_branch
        %101 = sbr.rel (%p98) target = $region54
      $region53: #{custom-call.7} parent=5 // pred_region
        #allocation2 [shape = 'f32[16,16]{1,0}', space=vmem, size = 0x2000, scoped, tag = 'rescaled input a']
        %s102 = ssub.s32 %s3, 1
        %s103 = sand.u32 %s8, 1
        %s104 = sand.u32 %s8, 1
        %s105 = smul.addr %s104, 16
        %s106 = scalar_lea.vmem [#allocation0], %s105
        %s107 = sand.u32 %s8, 1
        %s108 = sand.u32 %s8, 1
        %s109 = smul.addr %s108, 16
        %s110 = scalar_lea.vmem [#allocation0], %s109
        %s111 = sand.u32 %s8, 1
        %s112 = sand.u32 %s8, 1
        %s113 = smul.addr %s112, 16
        %s114 = scalar_lea.vmem [#allocation1], %s113
        %v115 = vlaneseq
        %v116 = vand.u32 %v115, 127
        %vm117 = vcmp.lt.s32.totalorder %v116, 16
        %v118 = vlaneseq
        %v119 = vshrl.u32 %v118, 7
        %vm121 = vcmp.eq.s32.totalorder %v119, %v116
        %v122 = vld [vmem:[%s106] sm:$0xff]
        %v123 = vsel %vm121, %v122, 0.0
        %124 = vadd.xlane.f32.xlu0 %v123
        %v125 = vpop.xlane.xlu0 %124
        %vm126 = vcmp.ge.s32.totalorder %v119, %v116
        %vm127 = vmand %vm126, %vm117
        %v128 = vsel %vm127, %v122, 0.0
        %v129 = vrcp.pop %v125
        %v130 = vmul.f32 %v125, %v129
        %v131 = vsub.f32 1.0, %v130
        %v132 = vmul.f32 %v129, %v131
        %v133 = vadd.f32 %v129, %v132
        %vm134 = vweird.f32 %v125
        %vm135 = vweird.f32 %v129
        %vm136 = vmor %vm134, %vm135
        %v137 = vsel %vm136, %v129, %v133
        %v138 = vand.u32 2147483647, %v125
        %vm139 = vcmp.eq.f32.partialorder %v138, 8.507059e+37
        %v140 = vand.u32 %v125, 2147483648
        %v141 = vor.u32 1.1754944e-38, %v140
        %v142 = vsel %vm139, %v141, %v137
        %v143 = vmul.f32 %v128, %v142
        %144 = vst [vmem:[#allocation2] sm:$0xff] %v143
        %s145 = scalar_lea.vmem %s106, 8 [#allocation0]
        %s146 = scalar_lea.vmem [#allocation2], 8
        %v147 = vlaneseq
        %v148 = vshrl.u32 %v147, 7
        %v149 = vadd.s32 %v148, 8
        %vm150 = vcmp.eq.s32.totalorder %v149, %v116
        %v151 = vld [vmem:[%s145] sm:$0xff]
        %v152 = vsel %vm150, %v151, 0.0
        %153 = vadd.xlane.f32.xlu0 %v152
        %v154 = vpop.xlane.xlu0 %153
        %vm155 = vcmp.ge.s32.totalorder %v149, %v116
        %vm156 = vmand %vm155, %vm117
        %v157 = vsel %vm156, %v151, 0.0
        %v158 = vrcp.pop %v154
        %v159 = vmul.f32 %v154, %v158
        %v160 = vsub.f32 1.0, %v159
        %v161 = vmul.f32 %v158, %v160
        %v162 = vadd.f32 %v158, %v161
        %vm163 = vweird.f32 %v154
        %vm164 = vweird.f32 %v158
        %vm165 = vmor %vm163, %vm164
        %v166 = vsel %vm165, %v158, %v162
        %v167 = vand.u32 2147483647, %v154
        %vm168 = vcmp.eq.f32.partialorder %v167, 8.507059e+37
        %v169 = vand.u32 %v154, 2147483648
        %v170 = vor.u32 1.1754944e-38, %v169
        %v171 = vsel %vm168, %v170, %v166
        %v172 = vmul.f32 %v157, %v171
        %173 = vst [vmem:[%s146] sm:$0xff] %v172
        %v174 = vlaneseq
        %v175 = vand.u32 %v174, 127
        %v176 = vlaneseq
        %v177 = vshrl.u32 %v176, 7
        %vm179 = vcmp.eq.s32.totalorder %v175, %v177
        %v180 = vlaneseq
        %v181 = vand.u32 %v180, 127
        %vm182 = vcmp.eq.s32.totalorder %v181, 0
        %v183 = vsel %vm182, 1.0, -1.0
        %v184 = vsel %vm179, %v183, 0.0
        %v185 = vlaneseq
        %v186 = vand.u32 %v185, 127
        %v187 = vlaneseq
        %v188 = vshrl.u32 %v187, 7
        %v189 = vadd.s32 %v188, 8
        %vm190 = vcmp.eq.s32.totalorder %v186, %v189
        %v191 = vsel %vm190, -1.0, 0.0
        %s192 = scalar_lea.vmem [#allocation2], 1
        %v193 = vld [vmem:[%s192] ss:$0 sm:$0xff]
        %v194 = vxor.u32 %v193, 2147483648
        %v195 = vlaneseq
        %v196 = vand.u32 %v195, 127
        %vm197 = vcmp.eq.s32.totalorder %v196, 1
        %v198 = vmul.f32 %v194, %v184
        %199 = vadd.xlane.f32.xlu0 %v198
        %v200 = vpop.xlane.xlu0 %199
        %v201 = vsel %vm197, %v200, %v184
        %s202 = scalar_lea.vmem [#allocation2], 2
        %v203 = vld [vmem:[%s202] ss:$0 sm:$0xff]
        %v204 = vxor.u32 %v203, 2147483648
        %v205 = vlaneseq
        %v206 = vand.u32 %v205, 127
        %vm207 = vcmp.eq.s32.totalorder %v206, 2
        %v208 = vmul.f32 %v204, %v201
        %209 = vadd.xlane.f32.xlu0 %v208
        %v210 = vpop.xlane.xlu0 %209
        %v211 = vsel %vm207, %v210, %v201
        %s212 = scalar_lea.vmem [#allocation2], 3
        %v213 = vld [vmem:[%s212] ss:$0 sm:$0xff]
        %v214 = vxor.u32 %v213, 2147483648
        %v215 = vlaneseq
        %v216 = vand.u32 %v215, 127
        %vm217 = vcmp.eq.s32.totalorder %v216, 3
        %v218 = vmul.f32 %v214, %v211
        %219 = vadd.xlane.f32.xlu0 %v218
        %v220 = vpop.xlane.xlu0 %219
        %v221 = vsel %vm217, %v220, %v211
        %s222 = scalar_lea.vmem [#allocation2], 4
        %v223 = vld [vmem:[%s222] ss:$0 sm:$0xff]
        %v224 = vxor.u32 %v223, 2147483648
        %v225 = vlaneseq
        %v226 = vand.u32 %v225, 127
        %vm227 = vcmp.eq.s32.totalorder %v226, 4
        %v228 = vmul.f32 %v224, %v221
        %229 = vadd.xlane.f32.xlu0 %v228
        %v230 = vpop.xlane.xlu0 %229
        %v231 = vsel %vm227, %v230, %v221
        %s232 = scalar_lea.vmem [#allocation2], 5
        %v233 = vld [vmem:[%s232] ss:$0 sm:$0xff]
        %v234 = vxor.u32 %v233, 2147483648
        %v235 = vlaneseq
        %v236 = vand.u32 %v235, 127
        %vm237 = vcmp.eq.s32.totalorder %v236, 5
        %v238 = vmul.f32 %v234, %v231
        %239 = vadd.xlane.f32.xlu0 %v238
        %v240 = vpop.xlane.xlu0 %239
        %v241 = vsel %vm237, %v240, %v231
        %s242 = scalar_lea.vmem [#allocation2], 6
        %v243 = vld [vmem:[%s242] ss:$0 sm:$0xff]
        %v244 = vxor.u32 %v243, 2147483648
        %v245 = vlaneseq
        %v246 = vand.u32 %v245, 127
        %vm247 = vcmp.eq.s32.totalorder %v246, 6
        %v248 = vmul.f32 %v244, %v241
        %249 = vadd.xlane.f32.xlu0 %v248
        %v250 = vpop.xlane.xlu0 %249
        %v251 = vsel %vm247, %v250, %v241
        %s252 = scalar_lea.vmem [#allocation2], 7
        %v253 = vld [vmem:[%s252] ss:$0 sm:$0xff]
        %v254 = vxor.u32 %v253, 2147483648
        %v255 = vlaneseq
        %v256 = vand.u32 %v255, 127
        %vm257 = vcmp.eq.s32.totalorder %v256, 7
        %v258 = vmul.f32 %v254, %v251
        %259 = vadd.xlane.f32.xlu0 %v258
        %v260 = vpop.xlane.xlu0 %259
        %v261 = vsel %vm257, %v260, %v251
        %s262 = scalar_lea.vmem [#allocation2], 8
        %v263 = vld [vmem:[%s262] ss:$0 sm:$0xff]
        %v264 = vxor.u32 %v263, 2147483648
        %v265 = vlaneseq
        %v266 = vand.u32 %v265, 127
        %vm267 = vcmp.eq.s32.totalorder %v266, 8
        %v268 = vmul.f32 %v264, %v261
        %269 = vadd.xlane.f32.xlu0 %v268
        %v270 = vpop.xlane.xlu0 %269
        %v271 = vsel %vm267, %v270, %v261
        %v272 = vmul.f32 %v264, %v191
        %273 = vadd.xlane.f32.xlu0 %v272
        %v274 = vpop.xlane.xlu0 %273
        %v275 = vsel %vm267, %v274, %v191
        %s276 = scalar_lea.vmem [#allocation2], 9
        %v277 = vld [vmem:[%s276] ss:$0 sm:$0xff]
        %v278 = vxor.u32 %v277, 2147483648
        %v279 = vlaneseq
        %v280 = vand.u32 %v279, 127
        %vm281 = vcmp.eq.s32.totalorder %v280, 9
        %v282 = vmul.f32 %v278, %v271
        %283 = vadd.xlane.f32.xlu0 %v282
        %v284 = vpop.xlane.xlu0 %283
        %v285 = vsel %vm281, %v284, %v271
        %v286 = vmul.f32 %v278, %v275
        %287 = vadd.xlane.f32.xlu0 %v286
        %v288 = vpop.xlane.xlu0 %287
        %v289 = vsel %vm281, %v288, %v275
        %s290 = scalar_lea.vmem [#allocation2], 10
        %v291 = vld [vmem:[%s290] ss:$0 sm:$0xff]
        %v292 = vxor.u32 %v291, 2147483648
        %v293 = vlaneseq
        %v294 = vand.u32 %v293, 127
        %vm295 = vcmp.eq.s32.totalorder %v294, 10
        %v296 = vmul.f32 %v292, %v285
        %297 = vadd.xlane.f32.xlu0 %v296
        %v298 = vpop.xlane.xlu0 %297
        %v299 = vsel %vm295, %v298, %v285
        %v300 = vmul.f32 %v292, %v289
        %301 = vadd.xlane.f32.xlu0 %v300
        %v302 = vpop.xlane.xlu0 %301
        %v303 = vsel %vm295, %v302, %v289
        %s304 = scalar_lea.vmem [#allocation2], 11
        %v305 = vld [vmem:[%s304] ss:$0 sm:$0xff]
        %v306 = vxor.u32 %v305, 2147483648
        %v307 = vlaneseq
        %v308 = vand.u32 %v307, 127
        %vm309 = vcmp.eq.s32.totalorder %v308, 11
        %v310 = vmul.f32 %v306, %v299
        %311 = vadd.xlane.f32.xlu0 %v310
        %v312 = vpop.xlane.xlu0 %311
        %v313 = vsel %vm309, %v312, %v299
        %v314 = vmul.f32 %v306, %v303
        %315 = vadd.xlane.f32.xlu0 %v314
        %v316 = vpop.xlane.xlu0 %315
        %v317 = vsel %vm309, %v316, %v303
        %s318 = scalar_lea.vmem [#allocation2], 12
        %v319 = vld [vmem:[%s318] ss:$0 sm:$0xff]
        %v320 = vxor.u32 %v319, 2147483648
        %v321 = vlaneseq
        %v322 = vand.u32 %v321, 127
        %vm323 = vcmp.eq.s32.totalorder %v322, 12
        %v324 = vmul.f32 %v320, %v313
        %325 = vadd.xlane.f32.xlu0 %v324
        %v326 = vpop.xlane.xlu0 %325
        %v327 = vsel %vm323, %v326, %v313
        %v328 = vmul.f32 %v320, %v317
        %329 = vadd.xlane.f32.xlu0 %v328
        %v330 = vpop.xlane.xlu0 %329
        %v331 = vsel %vm323, %v330, %v317
        %s332 = scalar_lea.vmem [#allocation2], 13
        %v333 = vld [vmem:[%s332] ss:$0 sm:$0xff]
        %v334 = vxor.u32 %v333, 2147483648
        %v335 = vlaneseq
        %v336 = vand.u32 %v335, 127
        %vm337 = vcmp.eq.s32.totalorder %v336, 13
        %v338 = vmul.f32 %v334, %v327
        %339 = vadd.xlane.f32.xlu0 %v338
        %v340 = vpop.xlane.xlu0 %339
        %v341 = vsel %vm337, %v340, %v327
        %v342 = vmul.f32 %v334, %v331
        %343 = vadd.xlane.f32.xlu0 %v342
        %v344 = vpop.xlane.xlu0 %343
        %v345 = vsel %vm337, %v344, %v331
        %s346 = scalar_lea.vmem [#allocation2], 14
        %v347 = vld [vmem:[%s346] ss:$0 sm:$0xff]
        %v348 = vxor.u32 %v347, 2147483648
        %v349 = vlaneseq
        %v350 = vand.u32 %v349, 127
        %vm351 = vcmp.eq.s32.totalorder %v350, 14
        %v352 = vmul.f32 %v348, %v341
        %353 = vadd.xlane.f32.xlu0 %v352
        %v354 = vpop.xlane.xlu0 %353
        %v355 = vsel %vm351, %v354, %v341
        %v356 = vmul.f32 %v348, %v345
        %357 = vadd.xlane.f32.xlu0 %v356
        %v358 = vpop.xlane.xlu0 %357
        %v359 = vsel %vm351, %v358, %v345
        %s360 = scalar_lea.vmem [#allocation2], 15
        %v361 = vld [vmem:[%s360] ss:$0 sm:$0xff]
        %v362 = vxor.u32 %v361, 2147483648
        %v363 = vlaneseq
        %v364 = vand.u32 %v363, 127
        %vm365 = vcmp.eq.s32.totalorder %v364, 15
        %v366 = vmul.f32 %v362, %v355
        %367 = vadd.xlane.f32.xlu0 %v366
        %v368 = vpop.xlane.xlu0 %367
        %v369 = vsel %vm365, %v368, %v355
        %v370 = vmul.f32 %v362, %v359
        %371 = vadd.xlane.f32.xlu0 %v370
        %v372 = vpop.xlane.xlu0 %371
        %v373 = vsel %vm365, %v372, %v359
        %v374 = vrcp.pop %v125
        %v375 = vmul.f32 %v125, %v374
        %v376 = vsub.f32 1.0, %v375
        %v377 = vmul.f32 %v374, %v376
        %v378 = vadd.f32 %v374, %v377
        %vm379 = vweird.f32 %v125
        %vm380 = vweird.f32 %v374
        %vm381 = vmor %vm379, %vm380
        %v382 = vsel %vm381, %v374, %v378
        %v383 = vand.u32 2147483647, %v125
        %vm384 = vcmp.eq.f32.partialorder %v383, 8.507059e+37
        %v385 = vand.u32 %v125, 2147483648
        %v386 = vor.u32 1.1754944e-38, %v385
        %v387 = vsel %vm384, %v386, %v382
        %v388 = vmul.f32 %v369, %v387
        %vm389 = vweird.f32 %v125
        %v390 = vsel %vm389, %v369, %v388
        %391 = vst [vmem:[%s114] sm:$0xff] %v390
        %v392 = vrcp.pop %v154
        %v393 = vmul.f32 %v154, %v392
        %v394 = vsub.f32 1.0, %v393
        %v395 = vmul.f32 %v392, %v394
        %v396 = vadd.f32 %v392, %v395
        %vm397 = vweird.f32 %v154
        %vm398 = vweird.f32 %v392
        %vm399 = vmor %vm397, %vm398
        %v400 = vsel %vm399, %v392, %v396
        %v401 = vand.u32 2147483647, %v154
        %vm402 = vcmp.eq.f32.partialorder %v401, 8.507059e+37
        %v403 = vand.u32 %v154, 2147483648
        %v404 = vor.u32 1.1754944e-38, %v403
        %v405 = vsel %vm402, %v404, %v400
        %v406 = vmul.f32 %v373, %v405
        %vm407 = vweird.f32 %v154
        %v408 = vsel %vm407, %v373, %v406
        %s409 = scalar_lea.vmem %s114, 8 [#allocation1]
        %410 = vst [vmem:[%s409] sm:$0xff] %v408
        %s411 = sand.u32 %s8, 1
        %s412 = sand.u32 %s8, 1
        %s413 = smul.addr %s412, 16
        %s414 = scalar_lea.vmem [#allocation1], %s413
        %s415 = sadd.s32 %s17, %s16
        %s416 = smul.addr %s15, 2
        %s417 = sadd.s32 %s415, %s416
        %s418 = smul.addr %s14, 2
        %s419 = sadd.s32 %s417, %s418
        %s420 = smul.addr %s419, 8
        %s421 = scalar_lea.vmem %s1, %s420
        // Predicated region
        $region55: #{custom-call.7} parent=53 // pred_check
          _
        $region56: #{custom-call.7} parent=53 // pred_check_branch
          %423 = sbr.rel (0) target = $region58
        $region57: #{custom-call.7} parent=53 // pred_region
          // Predicated region
          $region59: #{custom-call.7} parent=57 // pred_check
            _
          $region60: #{custom-call.7} parent=57 // pred_check_branch
            %425 = sbr.rel (0) target = $region62
          $region61: #{custom-call.7} parent=57 // pred_region
            // Predicated region
            $region74: #{custom-call.7} parent=61 // pred_check
              _
            $region75: #{custom-call.7} parent=61 // pred_check_branch
              %443 = sbr.rel (0) target = $region77
            $region76: #{custom-call.7} parent=61 // pred_region
              loop: start=0, step=1, limit=1
              $region78: #{custom-call.7} parent=76 // loop_pre_header
                _
              $region79: #{custom-call.7} parent=76 // loop_header
                %s445 = sphi 0, %s449
                %p446 = scmp.ge.s32.totalorder %s445, 1
                %s450 = sphi %s414, %s414
                %s451 = sphi %s421, %s421
              $region80: #{custom-call.7} parent=76 // loop_header_branch
                %448 = sbr.rel (%p446) target = $region84
              $region81: #{custom-call.7} parent=76 // loop_body
                %v452 = vld [vmem:[%s450] sm:$0xff]
                %453 = vst [vmem:[%s451] sm:$0xff] %v452
                %v454 = vld [vmem:[%s450 + $0x8] sm:$0xff]
                %455 = vst [vmem:[%s451 + $0x8] sm:$0xff] %v454
              $region82: #{custom-call.7} parent=76 // loop_footer
                %s449 = sadd.s32 1, %s445
              $region83: #{custom-call.7} parent=76 // loop_footer_branch
                %444 = sbr.rel target = $region79
              $region84: #{custom-call.7} parent=76 // loop_exit
                _
            $region77: #{custom-call.7} parent=61 // pred_fallthru
              _
            // Predicated region
            $region85: #{custom-call.7} parent=61 // pred_check
              _
            $region86: #{custom-call.7} parent=61 // pred_check_branch
              %457 = sbr.rel target = $region88
            $region87: #{custom-call.7} parent=61 // pred_region
              _
            $region88: #{custom-call.7} parent=61 // pred_fallthru
              _
          $region62: #{custom-call.7} parent=57 // pred_fallthru
            _
          // Predicated region
          $region63: #{custom-call.7} parent=57 // pred_check
            _
          $region64: #{custom-call.7} parent=57 // pred_check_branch
            %427 = sbr.rel target = $region66
          $region65: #{custom-call.7} parent=57 // pred_region
            %s429 = ssub.s32 256, 1
            loop: start=0, step=1, limit=1
            $region67: #{custom-call.7} parent=65 // loop_pre_header
              _
            $region68: #{custom-call.7} parent=65 // loop_header
              %s431 = sphi 0, %s435
              %p432 = scmp.ge.s32.totalorder %s431, 1
              %s436 = sphi %s414, %s414
              %s437 = sphi %s421, %s421
            $region69: #{custom-call.7} parent=65 // loop_header_branch
              %434 = sbr.rel (%p432) target = $region73
            $region70: #{custom-call.7} parent=65 // loop_body
              %v438 = vld [vmem:[%s436] sm:%s429]
              %439 = vst [vmem:[%s437] sm:%s429] %v438
              %v440 = vld [vmem:[%s436 + $0x8] sm:%s429]
              %441 = vst [vmem:[%s437 + $0x8] sm:%s429] %v440
            $region71: #{custom-call.7} parent=65 // loop_footer
              %s435 = sadd.s32 1, %s431
            $region72: #{custom-call.7} parent=65 // loop_footer_branch
              %430 = sbr.rel target = $region68
            $region73: #{custom-call.7} parent=65 // loop_exit
              _
          $region66: #{custom-call.7} parent=57 // pred_fallthru
            _
        $region58: #{custom-call.7} parent=53 // pred_fallthru
          _
        %458 = vnop
      $region54: #{custom-call.7} parent=5 // pred_fallthru
        _
      %p459 = scmp.le.s32.totalorder 2, %s3
      // Predicated region
      $region89: #{custom-call.7} parent=5 // pred_check
        %p460 = pneg %p459
      $region90: #{custom-call.7} parent=5 // pred_check_branch
        %462 = sbr.rel (%p460) target = $region92
      $region91: #{custom-call.7} parent=5 // pred_region
        %s463 = ssub.s32 %s3, 2
        %s464 = sand.u32 %s9, 1
        %s465 = sand.u32 %s9, 1
        %s466 = smul.addr %s465, 16
        %s467 = scalar_lea.vmem [#allocation1], %s466
      $region92: #{custom-call.7} parent=5 // pred_fallthru
        _
    $region6: #{custom-call.7} parent=1 // loop_footer
      %s7 = sadd.s32 1, %s3
    $region7: #{custom-call.7} parent=1 // loop_footer_branch
      %2 = sbr.rel target = $region3
    $region8: #{custom-call.7} parent=1 // loop_exit
      _

// kernel: regularized_fmnet.3
$region0: #{regularized_fmnet.3}
  #allocation0 [shape = 'u32[]', space=smem, size = 0x4, offset = 0x4, fixed_abs, tag = 'smem constant byte address 0x4 - core index']
  #allocation1 [shape = 'u32[72,128]{1,0:T(1,128)}', space=vmem, size = 0x9000, scoped, tag = 'internal scratch']
  #allocation2 [shape = 'f32[16,32]{1,0:T(8,128)}', space=vmem, size = 0x2000, scoped, tag = 'scratch operand']
  %s0 = inlined_call_operand.vmem [shape: f32[16,260], index: 0, kind: input, shape index: {}]
  %s1 = inlined_call_operand.vmem [shape: f32[260,32], index: 1, kind: input, shape index: {}]
  %s2 = inlined_call_operand.vmem [shape: f32[1,16,32], index: 2, kind: output, shape index: {}]
  %s3 = sld [smem:[#allocation0]]
  $region26: #{regularized_fmnet.3} parent=0
    _
  %s5 = ssub.s32 1, %s3
  %s6 = scalar_select 0, %s5, %s3
  // Predicated region
  $region2: #{regularized_fmnet.3} parent=0 // pred_check
    _
  $region3: #{regularized_fmnet.3} parent=0 // pred_check_branch
    %8 = sbr.rel (0) target = $region5
  $region4: #{regularized_fmnet.3} parent=0 // pred_region
    %s9 = sadd.s32 0, 0
    %p10 = scmp.lt.s32.totalorder %s9, 0
    %s11 = scalar_select %p10, %s9, 0
    %s12 = smul.u32 3, %s11
    %p13 = scmp.lt.s32.totalorder %s12, 2
    %s14 = scalar_select %p13, %s12, 2
    %s15 = smul.addr %s14, 8
    %s16 = scalar_lea.vmem %s0, %s15
    %s17 = sadd.s32 0, 0
    %p18 = scmp.lt.s32.totalorder %s17, 0
    %s19 = scalar_select %p18, %s17, 0
    %s20 = smul.u32 3, %s19
  $region5: #{regularized_fmnet.3} parent=0 // pred_fallthru
    _
  // Predicated region
  $region6: #{regularized_fmnet.3} parent=0 // pred_check
    _
  $region7: #{regularized_fmnet.3} parent=0 // pred_check_branch
    %22 = sbr.rel (0) target = $region9
  $region8: #{regularized_fmnet.3} parent=0 // pred_region
    %s23 = sadd.s32 0, 0
    %p24 = scmp.lt.s32.totalorder %s23, 0
    %s25 = scalar_select %p24, %s23, 0
    %s26 = smul.u32 48, %s25
    %s27 = ssub.s32 33, %s26
    %s28 = smul.u32 8, %s27
    %p29 = scmp.lt.s32.totalorder %s26, 32
    %s30 = scalar_select %p29, %s26, 32
    %s31 = smul.addr %s30, 8
    %s32 = scalar_lea.vmem %s1, %s31
    %s33 = sadd.s32 0, 0
    %p34 = scmp.lt.s32.totalorder %s33, 0
    %s35 = scalar_select %p34, %s33, 0
    %s36 = smul.u32 48, %s35
    %s37 = ssub.s32 33, %s36
    %s38 = smul.u32 8, %s37
  $region9: #{regularized_fmnet.3} parent=0 // pred_fallthru
    _
  %s39 = sadd.s32 0, 0
  %p40 = scmp.lt.s32.totalorder %s39, 0
  %s41 = scalar_select %p40, %s39, 0
  %s42 = smul.u32 3, %s41
  %p43 = scmp.lt.s32.totalorder %s42, 2
  %s44 = scalar_select %p43, %s42, 2
  %s45 = smul.addr %s44, 8
  %s46 = scalar_lea.vmem %s0, %s45
  %s47 = sadd.s32 0, 0
  %p48 = scmp.lt.s32.totalorder %s47, 0
  %s49 = scalar_select %p48, %s47, 0
  %s50 = smul.u32 48, %s49
  %s51 = ssub.s32 33, %s50
  %s52 = smul.u32 8, %s51
  %p53 = scmp.lt.s32.totalorder %s50, 32
  %s54 = scalar_select %p53, %s50, 32
  %s55 = smul.addr %s54, 8
  %s56 = scalar_lea.vmem %s1, %s55
  %s57 = sadd.s32 0, 0
  %p58 = scmp.lt.s32.totalorder %s57, 0
  %s59 = scalar_select %p58, %s57, 0
  %s60 = smul.u32 3, %s59
  %p61 = scmp.lt.s32.totalorder %s60, 2
  %s62 = scalar_select %p61, %s60, 2
  %s63 = smul.addr %s62, 8
  %s64 = scalar_lea.vmem %s0, %s63
  %s65 = sadd.s32 0, 0
  %p66 = scmp.lt.s32.totalorder %s65, 0
  %s67 = scalar_select %p66, %s65, 0
  %s68 = smul.u32 3, %s67
  %s69 = sadd.s32 0, 0
  %p70 = scmp.lt.s32.totalorder %s69, 0
  %s71 = scalar_select %p70, %s69, 0
  %s72 = smul.u32 48, %s71
  %s73 = ssub.s32 33, %s72
  %s74 = smul.u32 8, %s73
  %p75 = scmp.lt.s32.totalorder %s72, 32
  %s76 = scalar_select %p75, %s72, 32
  %s77 = smul.addr %s76, 8
  %s78 = scalar_lea.vmem %s1, %s77
  %s79 = sadd.s32 0, 0
  %p80 = scmp.lt.s32.totalorder %s79, 0
  %s81 = scalar_select %p80, %s79, 0
  %s82 = smul.u32 48, %s81
  %s83 = ssub.s32 33, %s82
  %s84 = smul.u32 8, %s83
  %p85 = scmp.eq.s32.totalorder 0, 0
  // Predicated region
  $region10: #{regularized_fmnet.3} parent=0 // pred_check
    %p86 = pneg %p85
  $region11: #{regularized_fmnet.3} parent=0 // pred_check_branch
    %88 = sbr.rel (%p86) target = $region13
  $region12: #{regularized_fmnet.3} parent=0 // pred_region
    %vm89 = vcmask 261120
    %90 = vst.msk [vmem:[#allocation2] sm:$0xff] %vm89, 0.0
    %91 = vst.msk [vmem:[#allocation2 + $0x8] sm:$0xff] %vm89, 0.0
  $region13: #{regularized_fmnet.3} parent=0 // pred_fallthru
    _
  %v92 = vld [vmem:[%s64] sm:$0xff]
  %v93 = vld [vmem:[%s64 + $0x8] sm:$0xff]
  %v94 = vld [vmem:[%s64 + $0x10] sm:$0xff]
  %v95 = vld [vmem:[%s64 + $0x18] sm:$0xff]
  %v96 = vld [vmem:[%s64 + $0x20] sm:$0xff]
  %v97 = vld [vmem:[%s64 + $0x28] sm:$0xff]
  %v98 = vld [vmem:[%s78] sm:$0xff]
  %v99 = vld [vmem:[%s78 + $0x8] sm:$0xff]
  %v100 = vld [vmem:[%s78 + $0x10] sm:$0xff]
  %v101 = vld [vmem:[%s78 + $0x18] sm:$0xff]
  %v102 = vld [vmem:[%s78 + $0x20] sm:$0xff]
  %v103 = vld [vmem:[%s78 + $0x28] sm:$0xff]
  %v104 = vld [vmem:[%s78 + $0x30] sm:$0xff]
  %v105 = vld [vmem:[%s78 + $0x38] sm:$0xff]
  %v106 = vld [vmem:[%s78 + $0x40] sm:$0xff]
  %v107 = vld [vmem:[%s78 + $0x48] sm:$0xff]
  %v108 = vld [vmem:[%s78 + $0x50] sm:$0xff]
  %v109 = vld [vmem:[%s78 + $0x58] sm:$0xff]
  %v110 = vld [vmem:[%s78 + $0x60] sm:$0xff]
  %v111 = vld [vmem:[%s78 + $0x68] sm:$0xff]
  %v112 = vld [vmem:[%s78 + $0x70] sm:$0xff]
  %v113 = vld [vmem:[%s78 + $0x78] sm:$0xff]
  %v114 = vld [vmem:[%s78 + $0x80] sm:$0xff]
  %v115 = vld [vmem:[%s78 + $0x88] sm:$0xff]
  %v116 = vld [vmem:[%s78 + $0x90] sm:$0xff]
  %v117 = vld [vmem:[%s78 + $0x98] sm:$0xff]
  %v118 = vld [vmem:[%s78 + $0xa0] sm:$0xff]
  %v119 = vld [vmem:[%s78 + $0xa8] sm:$0xff]
  %v120 = vld [vmem:[%s78 + $0xb0] sm:$0xff]
  %v121 = vld [vmem:[%s78 + $0xb8] sm:$0xff]
  %v122 = vld [vmem:[%s78 + $0xc0] sm:$0xff]
  %v123 = vld [vmem:[%s78 + $0xc8] sm:$0xff]
  %v124 = vld [vmem:[%s78 + $0xd0] sm:$0xff]
  %v125 = vld [vmem:[%s78 + $0xd8] sm:$0xff]
  %v126 = vld [vmem:[%s78 + $0xe0] sm:$0xff]
  %v127 = vld [vmem:[%s78 + $0xe8] sm:$0xff]
  %v128 = vld [vmem:[%s78 + $0xf0] sm:$0xff]
  %v129 = vld [vmem:[%s78 + $0xf8] sm:$0xff]
  %v130 = vld [vmem:[%s78 + $0x100] sm:$0xff]
  %v131 = vld [vmem:[%s78 + $0x108] sm:$0xff]
  %v132 = vld [vmem:[%s78 + $0x110] sm:$0xff]
  %v133 = vld [vmem:[%s78 + $0x118] sm:$0xff]
  %v134 = vld [vmem:[%s78 + $0x120] sm:$0xff]
  %v135 = vld [vmem:[%s78 + $0x128] sm:$0xff]
  %v136 = vld [vmem:[%s78 + $0x130] sm:$0xff]
  %v137 = vld [vmem:[%s78 + $0x138] sm:$0xff]
  %v138 = vld [vmem:[%s78 + $0x140] sm:$0xff]
  %v139 = vld [vmem:[%s78 + $0x148] sm:$0xff]
  %v140 = vld [vmem:[%s78 + $0x150] sm:$0xff]
  %v141 = vld [vmem:[%s78 + $0x158] sm:$0xff]
  %v142 = vld [vmem:[%s78 + $0x160] sm:$0xff]
  %v143 = vld [vmem:[%s78 + $0x168] sm:$0xff]
  %v144 = vld [vmem:[%s78 + $0x170] sm:$0xff]
  %v145 = vld [vmem:[%s78 + $0x178] sm:$0xff]
  %s146 = sadd.s32 0, 0
  %s147 = smul.u32 %s146, 384
  %v148 = vlaneseq
  %v149 = vand.u32 %v148, 127
  %v150 = vadd.s32 %v149, 128
  %v151 = vadd.s32 %v149, 256
  %v152 = vstv %s147
  %v153 = vadd.s32 %v152, %v149
  %v154 = vadd.s32 %v152, %v150
  %v155 = vadd.s32 %v152, %v151
  %vm156 = vcmp.lt.s32.totalorder %v153, 260
  %vm157 = vcmp.lt.s32.totalorder %v154, 260
  %vm158 = vcmp.lt.s32.totalorder %v155, 260
  %v159 = vsel %vm156, %v92, 0.0
  %v160 = vsel %vm157, %v93, 0.0
  %v161 = vsel %vm158, %v94, 0.0
  %v162 = vsel %vm156, %v95, 0.0
  %v163 = vsel %vm157, %v96, 0.0
  %v164 = vsel %vm158, %v97, 0.0
  %v165 = vlaneseq
  %v166 = vshrl.u32 %v165, 7
  %v167 = vadd.s32 %v166, 8
  %v168 = vadd.s32 %v166, 16
  %v169 = vadd.s32 %v166, 24
  %v170 = vadd.s32 %v166, 32
  %v171 = vadd.s32 %v166, 40
  %v172 = vadd.s32 %v166, 48
  %v173 = vadd.s32 %v166, 56
  %v174 = vadd.s32 %v166, 64
  %v175 = vadd.s32 %v166, 72
  %v176 = vadd.s32 %v166, 80
  %v177 = vadd.s32 %v166, 88
  %v178 = vadd.s32 %v166, 96
  %v179 = vadd.s32 %v166, 104
  %v180 = vadd.s32 %v166, 112
  %v181 = vadd.s32 %v166, 120
  %v182 = vadd.s32 %v166, 128
  %v183 = vadd.s32 %v166, 136
  %v184 = vadd.s32 %v166, 144
  %v185 = vadd.s32 %v166, 152
  %v186 = vadd.s32 %v166, 160
  %v187 = vadd.s32 %v166, 168
  %v188 = vadd.s32 %v166, 176
  %v189 = vadd.s32 %v166, 184
  %v190 = vadd.s32 %v166, 192
  %v191 = vadd.s32 %v166, 200
  %v192 = vadd.s32 %v166, 208
  %v193 = vadd.s32 %v166, 216
  %v194 = vadd.s32 %v166, 224
  %v195 = vadd.s32 %v166, 232
  %v196 = vadd.s32 %v166, 240
  %v197 = vadd.s32 %v166, 248
  %v198 = vadd.s32 %v166, 256
  %v199 = vadd.s32 %v166, 264
  %v200 = vadd.s32 %v166, 272
  %v201 = vadd.s32 %v166, 280
  %v202 = vadd.s32 %v166, 288
  %v203 = vadd.s32 %v166, 296
  %v204 = vadd.s32 %v166, 304
  %v205 = vadd.s32 %v166, 312
  %v206 = vadd.s32 %v166, 320
  %v207 = vadd.s32 %v166, 328
  %v208 = vadd.s32 %v166, 336
  %v209 = vadd.s32 %v166, 344
  %v210 = vadd.s32 %v166, 352
  %v211 = vadd.s32 %v166, 360
  %v212 = vadd.s32 %v166, 368
  %v213 = vadd.s32 %v166, 376
  %v214 = vadd.s32 %v152, %v166
  %v215 = vadd.s32 %v152, %v167
  %v216 = vadd.s32 %v152, %v168
  %v217 = vadd.s32 %v152, %v169
  %v218 = vadd.s32 %v152, %v170
  %v219 = vadd.s32 %v152, %v171
  %v220 = vadd.s32 %v152, %v172
  %v221 = vadd.s32 %v152, %v173
  %v222 = vadd.s32 %v152, %v174
  %v223 = vadd.s32 %v152, %v175
  %v224 = vadd.s32 %v152, %v176
  %v225 = vadd.s32 %v152, %v177
  %v226 = vadd.s32 %v152, %v178
  %v227 = vadd.s32 %v152, %v179
  %v228 = vadd.s32 %v152, %v180
  %v229 = vadd.s32 %v152, %v181
  %v230 = vadd.s32 %v152, %v182
  %v231 = vadd.s32 %v152, %v183
  %v232 = vadd.s32 %v152, %v184
  %v233 = vadd.s32 %v152, %v185
  %v234 = vadd.s32 %v152, %v186
  %v235 = vadd.s32 %v152, %v187
  %v236 = vadd.s32 %v152, %v188
  %v237 = vadd.s32 %v152, %v189
  %v238 = vadd.s32 %v152, %v190
  %v239 = vadd.s32 %v152, %v191
  %v240 = vadd.s32 %v152, %v192
  %v241 = vadd.s32 %v152, %v193
  %v242 = vadd.s32 %v152, %v194
  %v243 = vadd.s32 %v152, %v195
  %v244 = vadd.s32 %v152, %v196
  %v245 = vadd.s32 %v152, %v197
  %v246 = vadd.s32 %v152, %v198
  %v247 = vadd.s32 %v152, %v199
  %v248 = vadd.s32 %v152, %v200
  %v249 = vadd.s32 %v152, %v201
  %v250 = vadd.s32 %v152, %v202
  %v251 = vadd.s32 %v152, %v203
  %v252 = vadd.s32 %v152, %v204
  %v253 = vadd.s32 %v152, %v205
  %v254 = vadd.s32 %v152, %v206
  %v255 = vadd.s32 %v152, %v207
  %v256 = vadd.s32 %v152, %v208
  %v257 = vadd.s32 %v152, %v209
  %v258 = vadd.s32 %v152, %v210
  %v259 = vadd.s32 %v152, %v211
  %v260 = vadd.s32 %v152, %v212
  %v261 = vadd.s32 %v152, %v213
  %vm262 = vcmp.lt.s32.totalorder %v214, 260
  %vm263 = vcmp.lt.s32.totalorder %v215, 260
  %vm264 = vcmp.lt.s32.totalorder %v216, 260
  %vm265 = vcmp.lt.s32.totalorder %v217, 260
  %vm266 = vcmp.lt.s32.totalorder %v218, 260
  %vm267 = vcmp.lt.s32.totalorder %v219, 260
  %vm268 = vcmp.lt.s32.totalorder %v220, 260
  %vm269 = vcmp.lt.s32.totalorder %v221, 260
  %vm270 = vcmp.lt.s32.totalorder %v222, 260
  %vm271 = vcmp.lt.s32.totalorder %v223, 260
  %vm272 = vcmp.lt.s32.totalorder %v224, 260
  %vm273 = vcmp.lt.s32.totalorder %v225, 260
  %vm274 = vcmp.lt.s32.totalorder %v226, 260
  %vm275 = vcmp.lt.s32.totalorder %v227, 260
  %vm276 = vcmp.lt.s32.totalorder %v228, 260
  %vm277 = vcmp.lt.s32.totalorder %v229, 260
  %vm278 = vcmp.lt.s32.totalorder %v230, 260
  %vm279 = vcmp.lt.s32.totalorder %v231, 260
  %vm280 = vcmp.lt.s32.totalorder %v232, 260
  %vm281 = vcmp.lt.s32.totalorder %v233, 260
  %vm282 = vcmp.lt.s32.totalorder %v234, 260
  %vm283 = vcmp.lt.s32.totalorder %v235, 260
  %vm284 = vcmp.lt.s32.totalorder %v236, 260
  %vm285 = vcmp.lt.s32.totalorder %v237, 260
  %vm286 = vcmp.lt.s32.totalorder %v238, 260
  %vm287 = vcmp.lt.s32.totalorder %v239, 260
  %vm288 = vcmp.lt.s32.totalorder %v240, 260
  %vm289 = vcmp.lt.s32.totalorder %v241, 260
  %vm290 = vcmp.lt.s32.totalorder %v242, 260
  %vm291 = vcmp.lt.s32.totalorder %v243, 260
  %vm292 = vcmp.lt.s32.totalorder %v244, 260
  %vm293 = vcmp.lt.s32.totalorder %v245, 260
  %vm294 = vcmp.lt.s32.totalorder %v246, 260
  %vm295 = vcmp.lt.s32.totalorder %v247, 260
  %vm296 = vcmp.lt.s32.totalorder %v248, 260
  %vm297 = vcmp.lt.s32.totalorder %v249, 260
  %vm298 = vcmp.lt.s32.totalorder %v250, 260
  %vm299 = vcmp.lt.s32.totalorder %v251, 260
  %vm300 = vcmp.lt.s32.totalorder %v252, 260
  %vm301 = vcmp.lt.s32.totalorder %v253, 260
  %vm302 = vcmp.lt.s32.totalorder %v254, 260
  %vm303 = vcmp.lt.s32.totalorder %v255, 260
  %vm304 = vcmp.lt.s32.totalorder %v256, 260
  %vm305 = vcmp.lt.s32.totalorder %v257, 260
  %vm306 = vcmp.lt.s32.totalorder %v258, 260
  %vm307 = vcmp.lt.s32.totalorder %v259, 260
  %vm308 = vcmp.lt.s32.totalorder %v260, 260
  %vm309 = vcmp.lt.s32.totalorder %v261, 260
  %v310 = vsel %vm262, %v98, 0.0
  %v311 = vsel %vm263, %v99, 0.0
  %v312 = vsel %vm264, %v100, 0.0
  %v313 = vsel %vm265, %v101, 0.0
  %v314 = vsel %vm266, %v102, 0.0
  %v315 = vsel %vm267, %v103, 0.0
  %v316 = vsel %vm268, %v104, 0.0
  %v317 = vsel %vm269, %v105, 0.0
  %v318 = vsel %vm270, %v106, 0.0
  %v319 = vsel %vm271, %v107, 0.0
  %v320 = vsel %vm272, %v108, 0.0
  %v321 = vsel %vm273, %v109, 0.0
  %v322 = vsel %vm274, %v110, 0.0
  %v323 = vsel %vm275, %v111, 0.0
  %v324 = vsel %vm276, %v112, 0.0
  %v325 = vsel %vm277, %v113, 0.0
  %v326 = vsel %vm278, %v114, 0.0
  %v327 = vsel %vm279, %v115, 0.0
  %v328 = vsel %vm280, %v116, 0.0
  %v329 = vsel %vm281, %v117, 0.0
  %v330 = vsel %vm282, %v118, 0.0
  %v331 = vsel %vm283, %v119, 0.0
  %v332 = vsel %vm284, %v120, 0.0
  %v333 = vsel %vm285, %v121, 0.0
  %v334 = vsel %vm286, %v122, 0.0
  %v335 = vsel %vm287, %v123, 0.0
  %v336 = vsel %vm288, %v124, 0.0
  %v337 = vsel %vm289, %v125, 0.0
  %v338 = vsel %vm290, %v126, 0.0
  %v339 = vsel %vm291, %v127, 0.0
  %v340 = vsel %vm292, %v128, 0.0
  %v341 = vsel %vm293, %v129, 0.0
  %v342 = vsel %vm294, %v130, 0.0
  %v343 = vsel %vm295, %v131, 0.0
  %v344 = vsel %vm296, %v132, 0.0
  %v345 = vsel %vm297, %v133, 0.0
  %v346 = vsel %vm298, %v134, 0.0
  %v347 = vsel %vm299, %v135, 0.0
  %v348 = vsel %vm300, %v136, 0.0
  %v349 = vsel %vm301, %v137, 0.0
  %v350 = vsel %vm302, %v138, 0.0
  %v351 = vsel %vm303, %v139, 0.0
  %v352 = vsel %vm304, %v140, 0.0
  %v353 = vsel %vm305, %v141, 0.0
  %v354 = vsel %vm306, %v142, 0.0
  %v355 = vsel %vm307, %v143, 0.0
  %v356 = vsel %vm308, %v144, 0.0
  %v357 = vsel %vm309, %v145, 0.0
  %v358 = vld [vmem:[#allocation2] sm:$0xff]
  %v359 = vld [vmem:[#allocation2 + $0x8] sm:$0xff]
  %360 = vmatpush.msra.mxu0 %v325
  %361 = vmatpush.msra.mxu0 %v324
  %362 = vmatpush.msra.mxu0 %v323
  %363 = vmatpush.msra.mxu0 %v322
  %364 = vmatpush.msra.mxu0 %v321
  %365 = vmatpush.msra.mxu0 %v320
  %366 = vmatpush.msra.mxu0 %v319
  %367 = vmatpush.msra.mxu0 %v318
  %368 = vmatpush.msra.mxu0 %v317
  %369 = vmatpush.msra.mxu0 %v316
  %370 = vmatpush.msra.mxu0 %v315
  %371 = vmatpush.msra.mxu0 %v314
  %372 = vmatpush.msra.mxu0 %v313
  %373 = vmatpush.msra.mxu0 %v312
  %374 = vmatpush.msra.mxu0 %v311
  %375 = vmatpush.msra.mxu0 %v310
  %376 = vmatmul.f32.gmra.mxu0 %v159
  %v377 = vpop.f32.mrf.mxu0
  %v378 = vadd.f32 0.0, %v377
  %379 = vmatmul.f32.gmra.mxu0 %v162
  %v380 = vpop.f32.mrf.mxu0
  %v381 = vadd.f32 0.0, %v380
  %382 = vdwg.mxu0
  %383 = vmatpush.msra.mxu0 %v341
  %384 = vmatpush.msra.mxu0 %v340
  %385 = vmatpush.msra.mxu0 %v339
  %386 = vmatpush.msra.mxu0 %v338
  %387 = vmatpush.msra.mxu0 %v337
  %388 = vmatpush.msra.mxu0 %v336
  %389 = vmatpush.msra.mxu0 %v335
  %390 = vmatpush.msra.mxu0 %v334
  %391 = vmatpush.msra.mxu0 %v333
  %392 = vmatpush.msra.mxu0 %v332
  %393 = vmatpush.msra.mxu0 %v331
  %394 = vmatpush.msra.mxu0 %v330
  %395 = vmatpush.msra.mxu0 %v329
  %396 = vmatpush.msra.mxu0 %v328
  %397 = vmatpush.msra.mxu0 %v327
  %398 = vmatpush.msra.mxu0 %v326
  %399 = vmatmul.f32.gmra.mxu0 %v160
  %v400 = vpop.f32.mrf.mxu0
  %v401 = vadd.f32 %v378, %v400
  %402 = vmatmul.f32.gmra.mxu0 %v163
  %v403 = vpop.f32.mrf.mxu0
  %v404 = vadd.f32 %v381, %v403
  %405 = vdwg.mxu0
  %406 = vmatpush.msra.mxu0 %v357
  %407 = vmatpush.msra.mxu0 %v356
  %408 = vmatpush.msra.mxu0 %v355
  %409 = vmatpush.msra.mxu0 %v354
  %410 = vmatpush.msra.mxu0 %v353
  %411 = vmatpush.msra.mxu0 %v352
  %412 = vmatpush.msra.mxu0 %v351
  %413 = vmatpush.msra.mxu0 %v350
  %414 = vmatpush.msra.mxu0 %v349
  %415 = vmatpush.msra.mxu0 %v348
  %416 = vmatpush.msra.mxu0 %v347
  %417 = vmatpush.msra.mxu0 %v346
  %418 = vmatpush.msra.mxu0 %v345
  %419 = vmatpush.msra.mxu0 %v344
  %420 = vmatpush.msra.mxu0 %v343
  %421 = vmatpush.msra.mxu0 %v342
  %422 = vmatmul.f32.gmra.mxu0 %v161
  %v423 = vpop.f32.mrf.mxu0
  %v424 = vadd.f32 %v401, %v423
  %425 = vmatmul.f32.gmra.mxu0 %v164
  %v426 = vpop.f32.mrf.mxu0
  %v427 = vadd.f32 %v404, %v426
  %428 = vdwg.mxu0
  %v429 = vadd.f32 %v358, %v424
  %v430 = vadd.f32 %v359, %v427
  %vm431 = vcmask 261120
  %432 = vst.msk [vmem:[#allocation2] sm:$0xff] %vm431, %v429
  %433 = vst.msk [vmem:[#allocation2 + $0x8] sm:$0xff] %vm431, %v430
  // Predicated region
  $region14: #{regularized_fmnet.3} parent=0 // pred_check
    %p434 = pneg %p85
  $region15: #{regularized_fmnet.3} parent=0 // pred_check_branch
    %436 = sbr.rel (%p434) target = $region17
  $region16: #{regularized_fmnet.3} parent=0 // pred_region
    %v437 = vld [vmem:[#allocation2] sm:$0xff]
    %v438 = vld [vmem:[#allocation2 + $0x8] sm:$0xff]
    %439 = vst.msk [vmem:[%s2] sm:$0xff] %vm431, %v437
    %440 = vst.msk [vmem:[%s2 + $0x8] sm:$0xff] %vm431, %v438
  $region17: #{regularized_fmnet.3} parent=0 // pred_fallthru
    _
  // Predicated region
  $region18: #{regularized_fmnet.3} parent=0 // pred_check
    _
  $region19: #{regularized_fmnet.3} parent=0 // pred_check_branch
    %442 = sbr.rel (0) target = $region21
  $region20: #{regularized_fmnet.3} parent=0 // pred_region
    _
  $region21: #{regularized_fmnet.3} parent=0 // pred_fallthru
    _
  // Predicated region
  $region22: #{regularized_fmnet.3} parent=0 // pred_check
    _
  $region23: #{regularized_fmnet.3} parent=0 // pred_check_branch
    %444 = sbr.rel (0) target = $region25
  $region24: #{regularized_fmnet.3} parent=0 // pred_region
    _
  $region25: #{regularized_fmnet.3} parent=0 // pred_fallthru
    _

// kernel: regularized_fmnet.2
$region0: #{regularized_fmnet.2}
  #allocation0 [shape = 'u32[]', space=smem, size = 0x4, offset = 0x4, fixed_abs, tag = 'smem constant byte address 0x4 - core index']
  #allocation1 [shape = 'u32[72,128]{1,0:T(1,128)}', space=vmem, size = 0x9000, scoped, tag = 'internal scratch']
  #allocation2 [shape = 'f32[16,32]{1,0:T(8,128)}', space=vmem, size = 0x2000, scoped, tag = 'scratch operand']
  %s0 = inlined_call_operand.vmem [shape: f32[16,300], index: 0, kind: input, shape index: {}]
  %s1 = inlined_call_operand.vmem [shape: f32[300,32], index: 1, kind: input, shape index: {}]
  %s2 = inlined_call_operand.vmem [shape: f32[1,16,32], index: 2, kind: output, shape index: {}]
  %s3 = sld [smem:[#allocation0]]
  $region26: #{regularized_fmnet.2} parent=0
    _
  %s5 = ssub.s32 1, %s3
  %s6 = scalar_select 0, %s5, %s3
  // Predicated region
  $region2: #{regularized_fmnet.2} parent=0 // pred_check
    _
  $region3: #{regularized_fmnet.2} parent=0 // pred_check_branch
    %8 = sbr.rel (0) target = $region5
  $region4: #{regularized_fmnet.2} parent=0 // pred_region
    %s9 = sadd.s32 0, 0
    %p10 = scmp.lt.s32.totalorder %s9, 0
    %s11 = scalar_select %p10, %s9, 0
    %s12 = smul.u32 3, %s11
    %p13 = scmp.lt.s32.totalorder %s12, 2
    %s14 = scalar_select %p13, %s12, 2
    %s15 = smul.addr %s14, 8
    %s16 = scalar_lea.vmem %s0, %s15
    %s17 = sadd.s32 0, 0
    %p18 = scmp.lt.s32.totalorder %s17, 0
    %s19 = scalar_select %p18, %s17, 0
    %s20 = smul.u32 3, %s19
  $region5: #{regularized_fmnet.2} parent=0 // pred_fallthru
    _
  // Predicated region
  $region6: #{regularized_fmnet.2} parent=0 // pred_check
    _
  $region7: #{regularized_fmnet.2} parent=0 // pred_check_branch
    %22 = sbr.rel (0) target = $region9
  $region8: #{regularized_fmnet.2} parent=0 // pred_region
    %s23 = sadd.s32 0, 0
    %p24 = scmp.lt.s32.totalorder %s23, 0
    %s25 = scalar_select %p24, %s23, 0
    %s26 = smul.u32 48, %s25
    %s27 = ssub.s32 38, %s26
    %s28 = smul.u32 8, %s27
    %p29 = scmp.lt.s32.totalorder %s26, 37
    %s30 = scalar_select %p29, %s26, 37
    %s31 = smul.addr %s30, 8
    %s32 = scalar_lea.vmem %s1, %s31
    %s33 = sadd.s32 0, 0
    %p34 = scmp.lt.s32.totalorder %s33, 0
    %s35 = scalar_select %p34, %s33, 0
    %s36 = smul.u32 48, %s35
    %s37 = ssub.s32 38, %s36
    %s38 = smul.u32 8, %s37
  $region9: #{regularized_fmnet.2} parent=0 // pred_fallthru
    _
  %s39 = sadd.s32 0, 0
  %p40 = scmp.lt.s32.totalorder %s39, 0
  %s41 = scalar_select %p40, %s39, 0
  %s42 = smul.u32 3, %s41
  %p43 = scmp.lt.s32.totalorder %s42, 2
  %s44 = scalar_select %p43, %s42, 2
  %s45 = smul.addr %s44, 8
  %s46 = scalar_lea.vmem %s0, %s45
  %s47 = sadd.s32 0, 0
  %p48 = scmp.lt.s32.totalorder %s47, 0
  %s49 = scalar_select %p48, %s47, 0
  %s50 = smul.u32 48, %s49
  %s51 = ssub.s32 38, %s50
  %s52 = smul.u32 8, %s51
  %p53 = scmp.lt.s32.totalorder %s50, 37
  %s54 = scalar_select %p53, %s50, 37
  %s55 = smul.addr %s54, 8
  %s56 = scalar_lea.vmem %s1, %s55
  %s57 = sadd.s32 0, 0
  %p58 = scmp.lt.s32.totalorder %s57, 0
  %s59 = scalar_select %p58, %s57, 0
  %s60 = smul.u32 3, %s59
  %p61 = scmp.lt.s32.totalorder %s60, 2
  %s62 = scalar_select %p61, %s60, 2
  %s63 = smul.addr %s62, 8
  %s64 = scalar_lea.vmem %s0, %s63
  %s65 = sadd.s32 0, 0
  %p66 = scmp.lt.s32.totalorder %s65, 0
  %s67 = scalar_select %p66, %s65, 0
  %s68 = smul.u32 3, %s67
  %s69 = sadd.s32 0, 0
  %p70 = scmp.lt.s32.totalorder %s69, 0
  %s71 = scalar_select %p70, %s69, 0
  %s72 = smul.u32 48, %s71
  %s73 = ssub.s32 38, %s72
  %s74 = smul.u32 8, %s73
  %p75 = scmp.lt.s32.totalorder %s72, 37
  %s76 = scalar_select %p75, %s72, 37
  %s77 = smul.addr %s76, 8
  %s78 = scalar_lea.vmem %s1, %s77
  %s79 = sadd.s32 0, 0
  %p80 = scmp.lt.s32.totalorder %s79, 0
  %s81 = scalar_select %p80, %s79, 0
  %s82 = smul.u32 48, %s81
  %s83 = ssub.s32 38, %s82
  %s84 = smul.u32 8, %s83
  %p85 = scmp.eq.s32.totalorder 0, 0
  // Predicated region
  $region10: #{regularized_fmnet.2} parent=0 // pred_check
    %p86 = pneg %p85
  $region11: #{regularized_fmnet.2} parent=0 // pred_check_branch
    %88 = sbr.rel (%p86) target = $region13
  $region12: #{regularized_fmnet.2} parent=0 // pred_region
    %vm89 = vcmask 261120
    %90 = vst.msk [vmem:[#allocation2] sm:$0xff] %vm89, 0.0
    %91 = vst.msk [vmem:[#allocation2 + $0x8] sm:$0xff] %vm89, 0.0
  $region13: #{regularized_fmnet.2} parent=0 // pred_fallthru
    _
  %v92 = vld [vmem:[%s64] sm:$0xff]
  %v93 = vld [vmem:[%s64 + $0x8] sm:$0xff]
  %v94 = vld [vmem:[%s64 + $0x10] sm:$0xff]
  %v95 = vld [vmem:[%s64 + $0x18] sm:$0xff]
  %v96 = vld [vmem:[%s64 + $0x20] sm:$0xff]
  %v97 = vld [vmem:[%s64 + $0x28] sm:$0xff]
  %v98 = vld [vmem:[%s78] sm:$0xff]
  %v99 = vld [vmem:[%s78 + $0x8] sm:$0xff]
  %v100 = vld [vmem:[%s78 + $0x10] sm:$0xff]
  %v101 = vld [vmem:[%s78 + $0x18] sm:$0xff]
  %v102 = vld [vmem:[%s78 + $0x20] sm:$0xff]
  %v103 = vld [vmem:[%s78 + $0x28] sm:$0xff]
  %v104 = vld [vmem:[%s78 + $0x30] sm:$0xff]
  %v105 = vld [vmem:[%s78 + $0x38] sm:$0xff]
  %v106 = vld [vmem:[%s78 + $0x40] sm:$0xff]
  %v107 = vld [vmem:[%s78 + $0x48] sm:$0xff]
  %v108 = vld [vmem:[%s78 + $0x50] sm:$0xff]
  %v109 = vld [vmem:[%s78 + $0x58] sm:$0xff]
  %v110 = vld [vmem:[%s78 + $0x60] sm:$0xff]
  %v111 = vld [vmem:[%s78 + $0x68] sm:$0xff]
  %v112 = vld [vmem:[%s78 + $0x70] sm:$0xff]
  %v113 = vld [vmem:[%s78 + $0x78] sm:$0xff]
  %v114 = vld [vmem:[%s78 + $0x80] sm:$0xff]
  %v115 = vld [vmem:[%s78 + $0x88] sm:$0xff]
  %v116 = vld [vmem:[%s78 + $0x90] sm:$0xff]
  %v117 = vld [vmem:[%s78 + $0x98] sm:$0xff]
  %v118 = vld [vmem:[%s78 + $0xa0] sm:$0xff]
  %v119 = vld [vmem:[%s78 + $0xa8] sm:$0xff]
  %v120 = vld [vmem:[%s78 + $0xb0] sm:$0xff]
  %v121 = vld [vmem:[%s78 + $0xb8] sm:$0xff]
  %v122 = vld [vmem:[%s78 + $0xc0] sm:$0xff]
  %v123 = vld [vmem:[%s78 + $0xc8] sm:$0xff]
  %v124 = vld [vmem:[%s78 + $0xd0] sm:$0xff]
  %v125 = vld [vmem:[%s78 + $0xd8] sm:$0xff]
  %v126 = vld [vmem:[%s78 + $0xe0] sm:$0xff]
  %v127 = vld [vmem:[%s78 + $0xe8] sm:$0xff]
  %v128 = vld [vmem:[%s78 + $0xf0] sm:$0xff]
  %v129 = vld [vmem:[%s78 + $0xf8] sm:$0xff]
  %v130 = vld [vmem:[%s78 + $0x100] sm:$0xff]
  %v131 = vld [vmem:[%s78 + $0x108] sm:$0xff]
  %v132 = vld [vmem:[%s78 + $0x110] sm:$0xff]
  %v133 = vld [vmem:[%s78 + $0x118] sm:$0xff]
  %v134 = vld [vmem:[%s78 + $0x120] sm:$0xff]
  %v135 = vld [vmem:[%s78 + $0x128] sm:$0xff]
  %v136 = vld [vmem:[%s78 + $0x130] sm:$0xff]
  %v137 = vld [vmem:[%s78 + $0x138] sm:$0xff]
  %v138 = vld [vmem:[%s78 + $0x140] sm:$0xff]
  %v139 = vld [vmem:[%s78 + $0x148] sm:$0xff]
  %v140 = vld [vmem:[%s78 + $0x150] sm:$0xff]
  %v141 = vld [vmem:[%s78 + $0x158] sm:$0xff]
  %v142 = vld [vmem:[%s78 + $0x160] sm:$0xff]
  %v143 = vld [vmem:[%s78 + $0x168] sm:$0xff]
  %v144 = vld [vmem:[%s78 + $0x170] sm:$0xff]
  %v145 = vld [vmem:[%s78 + $0x178] sm:$0xff]
  %s146 = sadd.s32 0, 0
  %s147 = smul.u32 %s146, 384
  %v148 = vlaneseq
  %v149 = vand.u32 %v148, 127
  %v150 = vadd.s32 %v149, 128
  %v151 = vadd.s32 %v149, 256
  %v152 = vstv %s147
  %v153 = vadd.s32 %v152, %v149
  %v154 = vadd.s32 %v152, %v150
  %v155 = vadd.s32 %v152, %v151
  %vm156 = vcmp.lt.s32.totalorder %v153, 300
  %vm157 = vcmp.lt.s32.totalorder %v154, 300
  %vm158 = vcmp.lt.s32.totalorder %v155, 300
  %v159 = vsel %vm156, %v92, 0.0
  %v160 = vsel %vm157, %v93, 0.0
  %v161 = vsel %vm158, %v94, 0.0
  %v162 = vsel %vm156, %v95, 0.0
  %v163 = vsel %vm157, %v96, 0.0
  %v164 = vsel %vm158, %v97, 0.0
  %v165 = vlaneseq
  %v166 = vshrl.u32 %v165, 7
  %v167 = vadd.s32 %v166, 8
  %v168 = vadd.s32 %v166, 16
  %v169 = vadd.s32 %v166, 24
  %v170 = vadd.s32 %v166, 32
  %v171 = vadd.s32 %v166, 40
  %v172 = vadd.s32 %v166, 48
  %v173 = vadd.s32 %v166, 56
  %v174 = vadd.s32 %v166, 64
  %v175 = vadd.s32 %v166, 72
  %v176 = vadd.s32 %v166, 80
  %v177 = vadd.s32 %v166, 88
  %v178 = vadd.s32 %v166, 96
  %v179 = vadd.s32 %v166, 104
  %v180 = vadd.s32 %v166, 112
  %v181 = vadd.s32 %v166, 120
  %v182 = vadd.s32 %v166, 128
  %v183 = vadd.s32 %v166, 136
  %v184 = vadd.s32 %v166, 144
  %v185 = vadd.s32 %v166, 152
  %v186 = vadd.s32 %v166, 160
  %v187 = vadd.s32 %v166, 168
  %v188 = vadd.s32 %v166, 176
  %v189 = vadd.s32 %v166, 184
  %v190 = vadd.s32 %v166, 192
  %v191 = vadd.s32 %v166, 200
  %v192 = vadd.s32 %v166, 208
  %v193 = vadd.s32 %v166, 216
  %v194 = vadd.s32 %v166, 224
  %v195 = vadd.s32 %v166, 232
  %v196 = vadd.s32 %v166, 240
  %v197 = vadd.s32 %v166, 248
  %v198 = vadd.s32 %v166, 256
  %v199 = vadd.s32 %v166, 264
  %v200 = vadd.s32 %v166, 272
  %v201 = vadd.s32 %v166, 280
  %v202 = vadd.s32 %v166, 288
  %v203 = vadd.s32 %v166, 296
  %v204 = vadd.s32 %v166, 304
  %v205 = vadd.s32 %v166, 312
  %v206 = vadd.s32 %v166, 320
  %v207 = vadd.s32 %v166, 328
  %v208 = vadd.s32 %v166, 336
  %v209 = vadd.s32 %v166, 344
  %v210 = vadd.s32 %v166, 352
  %v211 = vadd.s32 %v166, 360
  %v212 = vadd.s32 %v166, 368
  %v213 = vadd.s32 %v166, 376
  %v214 = vadd.s32 %v152, %v166
  %v215 = vadd.s32 %v152, %v167
  %v216 = vadd.s32 %v152, %v168
  %v217 = vadd.s32 %v152, %v169
  %v218 = vadd.s32 %v152, %v170
  %v219 = vadd.s32 %v152, %v171
  %v220 = vadd.s32 %v152, %v172
  %v221 = vadd.s32 %v152, %v173
  %v222 = vadd.s32 %v152, %v174
  %v223 = vadd.s32 %v152, %v175
  %v224 = vadd.s32 %v152, %v176
  %v225 = vadd.s32 %v152, %v177
  %v226 = vadd.s32 %v152, %v178
  %v227 = vadd.s32 %v152, %v179
  %v228 = vadd.s32 %v152, %v180
  %v229 = vadd.s32 %v152, %v181
  %v230 = vadd.s32 %v152, %v182
  %v231 = vadd.s32 %v152, %v183
  %v232 = vadd.s32 %v152, %v184
  %v233 = vadd.s32 %v152, %v185
  %v234 = vadd.s32 %v152, %v186
  %v235 = vadd.s32 %v152, %v187
  %v236 = vadd.s32 %v152, %v188
  %v237 = vadd.s32 %v152, %v189
  %v238 = vadd.s32 %v152, %v190
  %v239 = vadd.s32 %v152, %v191
  %v240 = vadd.s32 %v152, %v192
  %v241 = vadd.s32 %v152, %v193
  %v242 = vadd.s32 %v152, %v194
  %v243 = vadd.s32 %v152, %v195
  %v244 = vadd.s32 %v152, %v196
  %v245 = vadd.s32 %v152, %v197
  %v246 = vadd.s32 %v152, %v198
  %v247 = vadd.s32 %v152, %v199
  %v248 = vadd.s32 %v152, %v200
  %v249 = vadd.s32 %v152, %v201
  %v250 = vadd.s32 %v152, %v202
  %v251 = vadd.s32 %v152, %v203
  %v252 = vadd.s32 %v152, %v204
  %v253 = vadd.s32 %v152, %v205
  %v254 = vadd.s32 %v152, %v206
  %v255 = vadd.s32 %v152, %v207
  %v256 = vadd.s32 %v152, %v208
  %v257 = vadd.s32 %v152, %v209
  %v258 = vadd.s32 %v152, %v210
  %v259 = vadd.s32 %v152, %v211
  %v260 = vadd.s32 %v152, %v212
  %v261 = vadd.s32 %v152, %v213
  %vm262 = vcmp.lt.s32.totalorder %v214, 300
  %vm263 = vcmp.lt.s32.totalorder %v215, 300
  %vm264 = vcmp.lt.s32.totalorder %v216, 300
  %vm265 = vcmp.lt.s32.totalorder %v217, 300
  %vm266 = vcmp.lt.s32.totalorder %v218, 300
  %vm267 = vcmp.lt.s32.totalorder %v219, 300
  %vm268 = vcmp.lt.s32.totalorder %v220, 300
  %vm269 = vcmp.lt.s32.totalorder %v221, 300
  %vm270 = vcmp.lt.s32.totalorder %v222, 300
  %vm271 = vcmp.lt.s32.totalorder %v223, 300
  %vm272 = vcmp.lt.s32.totalorder %v224, 300
  %vm273 = vcmp.lt.s32.totalorder %v225, 300
  %vm274 = vcmp.lt.s32.totalorder %v226, 300
  %vm275 = vcmp.lt.s32.totalorder %v227, 300
  %vm276 = vcmp.lt.s32.totalorder %v228, 300
  %vm277 = vcmp.lt.s32.totalorder %v229, 300
  %vm278 = vcmp.lt.s32.totalorder %v230, 300
  %vm279 = vcmp.lt.s32.totalorder %v231, 300
  %vm280 = vcmp.lt.s32.totalorder %v232, 300
  %vm281 = vcmp.lt.s32.totalorder %v233, 300
  %vm282 = vcmp.lt.s32.totalorder %v234, 300
  %vm283 = vcmp.lt.s32.totalorder %v235, 300
  %vm284 = vcmp.lt.s32.totalorder %v236, 300
  %vm285 = vcmp.lt.s32.totalorder %v237, 300
  %vm286 = vcmp.lt.s32.totalorder %v238, 300
  %vm287 = vcmp.lt.s32.totalorder %v239, 300
  %vm288 = vcmp.lt.s32.totalorder %v240, 300
  %vm289 = vcmp.lt.s32.totalorder %v241, 300
  %vm290 = vcmp.lt.s32.totalorder %v242, 300
  %vm291 = vcmp.lt.s32.totalorder %v243, 300
  %vm292 = vcmp.lt.s32.totalorder %v244, 300
  %vm293 = vcmp.lt.s32.totalorder %v245, 300
  %vm294 = vcmp.lt.s32.totalorder %v246, 300
  %vm295 = vcmp.lt.s32.totalorder %v247, 300
  %vm296 = vcmp.lt.s32.totalorder %v248, 300
  %vm297 = vcmp.lt.s32.totalorder %v249, 300
  %vm298 = vcmp.lt.s32.totalorder %v250, 300
  %vm299 = vcmp.lt.s32.totalorder %v251, 300
  %vm300 = vcmp.lt.s32.totalorder %v252, 300
  %vm301 = vcmp.lt.s32.totalorder %v253, 300
  %vm302 = vcmp.lt.s32.totalorder %v254, 300
  %vm303 = vcmp.lt.s32.totalorder %v255, 300
  %vm304 = vcmp.lt.s32.totalorder %v256, 300
  %vm305 = vcmp.lt.s32.totalorder %v257, 300
  %vm306 = vcmp.lt.s32.totalorder %v258, 300
  %vm307 = vcmp.lt.s32.totalorder %v259, 300
  %vm308 = vcmp.lt.s32.totalorder %v260, 300
  %vm309 = vcmp.lt.s32.totalorder %v261, 300
  %v310 = vsel %vm262, %v98, 0.0
  %v311 = vsel %vm263, %v99, 0.0
  %v312 = vsel %vm264, %v100, 0.0
  %v313 = vsel %vm265, %v101, 0.0
  %v314 = vsel %vm266, %v102, 0.0
  %v315 = vsel %vm267, %v103, 0.0
  %v316 = vsel %vm268, %v104, 0.0
  %v317 = vsel %vm269, %v105, 0.0
  %v318 = vsel %vm270, %v106, 0.0
  %v319 = vsel %vm271, %v107, 0.0
  %v320 = vsel %vm272, %v108, 0.0
  %v321 = vsel %vm273, %v109, 0.0
  %v322 = vsel %vm274, %v110, 0.0
  %v323 = vsel %vm275, %v111, 0.0
  %v324 = vsel %vm276, %v112, 0.0
  %v325 = vsel %vm277, %v113, 0.0
  %v326 = vsel %vm278, %v114, 0.0
  %v327 = vsel %vm279, %v115, 0.0
  %v328 = vsel %vm280, %v116, 0.0
  %v329 = vsel %vm281, %v117, 0.0
  %v330 = vsel %vm282, %v118, 0.0
  %v331 = vsel %vm283, %v119, 0.0
  %v332 = vsel %vm284, %v120, 0.0
  %v333 = vsel %vm285, %v121, 0.0
  %v334 = vsel %vm286, %v122, 0.0
  %v335 = vsel %vm287, %v123, 0.0
  %v336 = vsel %vm288, %v124, 0.0
  %v337 = vsel %vm289, %v125, 0.0
  %v338 = vsel %vm290, %v126, 0.0
  %v339 = vsel %vm291, %v127, 0.0
  %v340 = vsel %vm292, %v128, 0.0
  %v341 = vsel %vm293, %v129, 0.0
  %v342 = vsel %vm294, %v130, 0.0
  %v343 = vsel %vm295, %v131, 0.0
  %v344 = vsel %vm296, %v132, 0.0
  %v345 = vsel %vm297, %v133, 0.0
  %v346 = vsel %vm298, %v134, 0.0
  %v347 = vsel %vm299, %v135, 0.0
  %v348 = vsel %vm300, %v136, 0.0
  %v349 = vsel %vm301, %v137, 0.0
  %v350 = vsel %vm302, %v138, 0.0
  %v351 = vsel %vm303, %v139, 0.0
  %v352 = vsel %vm304, %v140, 0.0
  %v353 = vsel %vm305, %v141, 0.0
  %v354 = vsel %vm306, %v142, 0.0
  %v355 = vsel %vm307, %v143, 0.0
  %v356 = vsel %vm308, %v144, 0.0
  %v357 = vsel %vm309, %v145, 0.0
  %v358 = vld [vmem:[#allocation2] sm:$0xff]
  %v359 = vld [vmem:[#allocation2 + $0x8] sm:$0xff]
  %360 = vmatpush.msra.mxu0 %v325
  %361 = vmatpush.msra.mxu0 %v324
  %362 = vmatpush.msra.mxu0 %v323
  %363 = vmatpush.msra.mxu0 %v322
  %364 = vmatpush.msra.mxu0 %v321
  %365 = vmatpush.msra.mxu0 %v320
  %366 = vmatpush.msra.mxu0 %v319
  %367 = vmatpush.msra.mxu0 %v318
  %368 = vmatpush.msra.mxu0 %v317
  %369 = vmatpush.msra.mxu0 %v316
  %370 = vmatpush.msra.mxu0 %v315
  %371 = vmatpush.msra.mxu0 %v314
  %372 = vmatpush.msra.mxu0 %v313
  %373 = vmatpush.msra.mxu0 %v312
  %374 = vmatpush.msra.mxu0 %v311
  %375 = vmatpush.msra.mxu0 %v310
  %376 = vmatmul.f32.gmra.mxu0 %v159
  %v377 = vpop.f32.mrf.mxu0
  %v378 = vadd.f32 0.0, %v377
  %379 = vmatmul.f32.gmra.mxu0 %v162
  %v380 = vpop.f32.mrf.mxu0
  %v381 = vadd.f32 0.0, %v380
  %382 = vdwg.mxu0
  %383 = vmatpush.msra.mxu0 %v341
  %384 = vmatpush.msra.mxu0 %v340
  %385 = vmatpush.msra.mxu0 %v339
  %386 = vmatpush.msra.mxu0 %v338
  %387 = vmatpush.msra.mxu0 %v337
  %388 = vmatpush.msra.mxu0 %v336
  %389 = vmatpush.msra.mxu0 %v335
  %390 = vmatpush.msra.mxu0 %v334
  %391 = vmatpush.msra.mxu0 %v333
  %392 = vmatpush.msra.mxu0 %v332
  %393 = vmatpush.msra.mxu0 %v331
  %394 = vmatpush.msra.mxu0 %v330
  %395 = vmatpush.msra.mxu0 %v329
  %396 = vmatpush.msra.mxu0 %v328
  %397 = vmatpush.msra.mxu0 %v327
  %398 = vmatpush.msra.mxu0 %v326
  %399 = vmatmul.f32.gmra.mxu0 %v160
  %v400 = vpop.f32.mrf.mxu0
  %v401 = vadd.f32 %v378, %v400
  %402 = vmatmul.f32.gmra.mxu0 %v163
  %v403 = vpop.f32.mrf.mxu0
  %v404 = vadd.f32 %v381, %v403
  %405 = vdwg.mxu0
  %406 = vmatpush.msra.mxu0 %v357
  %407 = vmatpush.msra.mxu0 %v356
  %408 = vmatpush.msra.mxu0 %v355
  %409 = vmatpush.msra.mxu0 %v354
  %410 = vmatpush.msra.mxu0 %v353
  %411 = vmatpush.msra.mxu0 %v352
  %412 = vmatpush.msra.mxu0 %v351
  %413 = vmatpush.msra.mxu0 %v350
  %414 = vmatpush.msra.mxu0 %v349
  %415 = vmatpush.msra.mxu0 %v348
  %416 = vmatpush.msra.mxu0 %v347
  %417 = vmatpush.msra.mxu0 %v346
  %418 = vmatpush.msra.mxu0 %v345
  %419 = vmatpush.msra.mxu0 %v344
  %420 = vmatpush.msra.mxu0 %v343
  %421 = vmatpush.msra.mxu0 %v342
  %422 = vmatmul.f32.gmra.mxu0 %v161
  %v423 = vpop.f32.mrf.mxu0
  %v424 = vadd.f32 %v401, %v423
  %425 = vmatmul.f32.gmra.mxu0 %v164
  %v426 = vpop.f32.mrf.mxu0
  %v427 = vadd.f32 %v404, %v426
  %428 = vdwg.mxu0
  %v429 = vadd.f32 %v358, %v424
  %v430 = vadd.f32 %v359, %v427
  %vm431 = vcmask 261120
  %432 = vst.msk [vmem:[#allocation2] sm:$0xff] %vm431, %v429
  %433 = vst.msk [vmem:[#allocation2 + $0x8] sm:$0xff] %vm431, %v430
  // Predicated region
  $region14: #{regularized_fmnet.2} parent=0 // pred_check
    %p434 = pneg %p85
  $region15: #{regularized_fmnet.2} parent=0 // pred_check_branch
    %436 = sbr.rel (%p434) target = $region17
  $region16: #{regularized_fmnet.2} parent=0 // pred_region
    %v437 = vld [vmem:[#allocation2] sm:$0xff]
    %v438 = vld [vmem:[#allocation2 + $0x8] sm:$0xff]
    %439 = vst.msk [vmem:[%s2] sm:$0xff] %vm431, %v437
    %440 = vst.msk [vmem:[%s2 + $0x8] sm:$0xff] %vm431, %v438
  $region17: #{regularized_fmnet.2} parent=0 // pred_fallthru
    _
  // Predicated region
  $region18: #{regularized_fmnet.2} parent=0 // pred_check
    _
  $region19: #{regularized_fmnet.2} parent=0 // pred_check_branch
    %442 = sbr.rel (0) target = $region21
  $region20: #{regularized_fmnet.2} parent=0 // pred_region
    _
  $region21: #{regularized_fmnet.2} parent=0 // pred_fallthru
    _
  // Predicated region
  $region22: #{regularized_fmnet.2} parent=0 // pred_check
    _
  $region23: #{regularized_fmnet.2} parent=0 // pred_check_branch
    %444 = sbr.rel (0) target = $region25
  $region24: #{regularized_fmnet.2} parent=0 // pred_region
    _
  $region25: #{regularized_fmnet.2} parent=0 // pred_fallthru
    _

</llo_original>
